<compile_context>
chip_gen: v7x
topology: tpu7x:2x2x1
jax: 0.10.0
libtpu: 0.0.40
codegen_flags: <defaults>
</compile_context>

<pallas_src>
import functools

import jax
import jax.numpy as jnp
from jax import lax
from jax.experimental import pallas as pl
from jax.experimental.pallas import tpu as pltpu


# ---------------------------------------------------------------------------
# Fused Pallas kernel (one image per grid step)
# ---------------------------------------------------------------------------
def _fused_downsample_kernel(x_ref, w1_ref, b1_ref, w2_ref, b2_ref,
                             w3_ref, b3_ref, o_ref, tap_buf, mp2_buf,
                             *, Ho, Wo, C, Cint):
    """Whole DownsampleBlock for one image.

    x_ref   : (1, 4*Ho*Wo, C)   bf16, parity-major rows (see module docstring)
    o_ref   : (1, Ho*Wo, 2*C)   lane-dense output block
    tap_buf : (Ho*Wo, 9*Cint)   bf16 scratch -> single fused stage-2 GEMM
    mp2_buf : (Ho*Wo, 2*C)      f32  scratch -> doubled-maxpool residual
    """
    f32 = jnp.float32
    bf16 = jnp.bfloat16
    M2 = Ho * Wo

    x = x_ref[0]                                                   # (4*M2, C) bf16

    # ---- maxpool(2,2) branch: max over the four parity planes of x ---------
    mp = jnp.maximum(jnp.maximum(x[0:M2], x[M2:2 * M2]),
                     jnp.maximum(x[2 * M2:3 * M2], x[3 * M2:4 * M2]))
    mp = mp.astype(f32)                                            # (M2, C)
    # torch.cat([mp, mp], dim=1): assemble the lane-dense residual once.
    mp2_buf[:, 0:C] = mp
    mp2_buf[:, C:2 * C] = mp

    # ---- stage 1: 1x1 conv (bf16 MXU) + folded BN + ReLU (f32 VPU) ----------
    h1 = jnp.dot(x, w1_ref[...], preferred_element_type=f32) + b1_ref[...]
    h1 = jnp.maximum(h1, 0.0)                                      # (4*M2, Cint) f32

    # ---- stage 2: 3x3 / stride 2 / pad 1 conv + folded BN + ReLU ------------
    # Tap (ky, kx) reads h1[2ho + ky - 1, 2wo + kx - 1].  On flattened row
    # index m = ho*Wo + wo this is parity plane p shifted down by
    # s = Wo*(ky == 0) + (kx == 0) rows, i.e. the contiguous h1 row slice
    # starting at p*M2 - s, with the padding-halo rows (ho==0 and/or wo==0)
    # zeroed by a cheap (M2, 1) mask.  No matmuls, no lane shuffles.
    row = lax.broadcasted_iota(jnp.int32, (M2, 1), 0)
    mask_wo = ((row % Wo) != 0).astype(f32)                        # wo > 0
    mask_ho = (row >= Wo).astype(f32)                              # ho > 0
    mask_howo = mask_ho * mask_wo

    # (parity plane p, row shift s, halo mask) in (ky, kx) order — matches the
    # (9*Cint, Cint) row ordering of w2_ref.
    tap_specs = (
        (3, Wo + 1, mask_howo),   # (0,0) -> h1[2ho-1, 2wo-1]
        (2, Wo,     mask_ho),     # (0,1) -> h1[2ho-1, 2wo  ]
        (3, Wo,     mask_ho),     # (0,2) -> h1[2ho-1, 2wo+1]
        (1, 1,      mask_wo),     # (1,0) -> h1[2ho  , 2wo-1]
        (0, 0,      None),        # (1,1) -> h1[2ho  , 2wo  ]
        (1, 0,      None),        # (1,2) -> h1[2ho  , 2wo+1]
        (3, 1,      mask_wo),     # (2,0) -> h1[2ho+1, 2wo-1]
        (2, 0,      None),        # (2,1) -> h1[2ho+1, 2wo  ]
        (3, 0,      None),        # (2,2) -> h1[2ho+1, 2wo+1]
    )
    for t, (p, s, mask) in enumerate(tap_specs):
        start = p * M2 - s
        tap = h1[start:start + M2]                                 # (M2, Cint)
        if mask is not None:
            tap = tap * mask
        tap_buf[:, t * Cint:(t + 1) * Cint] = tap.astype(bf16)

    # Single fused GEMM: K = 9*Cint instead of 9 tiny K=Cint GEMMs.
    h2 = jnp.dot(tap_buf[...], w2_ref[...],
                 preferred_element_type=f32) + b2_ref[...]
    h2 = jnp.maximum(h2, 0.0)                                      # (M2, Cint) f32

    # ---- stage 3: 1x1 conv + folded BN, + doubled-maxpool add, ReLU ---------
    y = jnp.dot(h2.astype(bf16), w3_ref[...],
                preferred_element_type=f32) + b3_ref[...]          # (M2, 2C) f32
    o_ref[0] = jnp.maximum(y + mp2_buf[...], 0.0).astype(o_ref.dtype)


# ---------------------------------------------------------------------------
# Full DownsampleBlock forward (wrapper: layout plumbing + BN folding only)
# ---------------------------------------------------------------------------
def downsample_block_forward(x_nchw, params):
    (w1, s1, b1, w2_hwio, s2, b2, w3, s3, b3) = params
    N, C, H, W = x_nchw.shape
    Cint = w1.shape[1]
    # TODO(synk): odd H/W (PyTorch floor-mode maxpool / conv) not handled; even assumed.
    Ho, Wo = H // 2, W // 2
    M2 = Ho * Wo
    f32, bf16 = jnp.float32, jnp.bfloat16

    # Single non-duplicating relayout: NCHW -> parity-major rows, cast to bf16
    # (halves the activation DMA bytes feeding the MXU).
    x_nhwc = jnp.transpose(x_nchw, (0, 2, 3, 1))                   # (N, H, W, C)
    x_par = x_nhwc.reshape(N, Ho, 2, Wo, 2, C).transpose(0, 2, 4, 1, 3, 5)
    x_flat = x_par.reshape(N, 4 * M2, C).astype(bf16)              # (N, 4*M2, C)

    # Fold eval-mode BN (scale/bias) into bf16 conv weights + f32 bias rows.
    w1e = (w1 * s1[None, :]).astype(bf16)                          # (C, Cint)
    w2e = (w2_hwio * s2[None, None, None, :]).reshape(9 * Cint, Cint).astype(bf16)
    w3e = (w3 * s3[None, :]).astype(bf16)                          # (Cint, 2C)
    b1r = b1.reshape(1, Cint).astype(f32)
    b2r = b2.reshape(1, Cint).astype(f32)
    b3r = b3.reshape(1, 2 * C).astype(f32)

    kernel = functools.partial(_fused_downsample_kernel,
                               Ho=Ho, Wo=Wo, C=C, Cint=Cint)
    out = pl.pallas_call(
        kernel,
        out_shape=jax.ShapeDtypeStruct((N, M2, 2 * C), x_nchw.dtype),
        grid=(N,),
        in_specs=[
            pl.BlockSpec((1, 4 * M2, C), lambda n: (n, 0, 0)),     # x (per image)
            pl.BlockSpec((C, Cint), lambda n: (0, 0)),             # w1 * s1
            pl.BlockSpec((1, Cint), lambda n: (0, 0)),             # b1
            pl.BlockSpec((9 * Cint, Cint), lambda n: (0, 0)),      # w2 * s2 (fused taps)
            pl.BlockSpec((1, Cint), lambda n: (0, 0)),             # b2
            pl.BlockSpec((Cint, 2 * C), lambda n: (0, 0)),         # w3 * s3
            pl.BlockSpec((1, 2 * C), lambda n: (0, 0)),            # b3
        ],
        out_specs=pl.BlockSpec((1, M2, 2 * C), lambda n: (n, 0, 0)),
        scratch_shapes=[
            pltpu.VMEM((M2, 9 * Cint), bf16),                      # fused tap matrix
            pltpu.VMEM((M2, 2 * C), f32),                          # doubled maxpool
        ],
        compiler_params=pltpu.CompilerParams(
            dimension_semantics=("parallel",),
            vmem_limit_bytes=32 * 1024 * 1024),                    # test block ~tens of KiB
    )(x_flat, w1e, b1r, w2e, b2r, w3e, b3r)

    # (N, Ho*Wo, 2C) -> NCHW (N, 2C, Ho, Wo); channel index is unchanged.
    return out.reshape(N, Ho, Wo, 2 * C).transpose(0, 3, 1, 2)


# ---------------------------------------------------------------------------
# Deterministic parameter initialization (eval-mode BN folded to scale/bias)
# ---------------------------------------------------------------------------
def init_params(key, in_channels, internal_ratio=4, eps=1e-5):
    cint = in_channels // internal_ratio
    cout = in_channels * 2
    ks = jax.random.split(key, 12)

    def bn_fold(kg, kb, km, kv, n):
        gamma = jax.random.normal(kg, (n,), jnp.float32) * 0.5 + 1.0
        beta = jax.random.normal(kb, (n,), jnp.float32) * 0.1
        mean = jax.random.normal(km, (n,), jnp.float32) * 0.1
        var = jnp.abs(jax.random.normal(kv, (n,), jnp.float32)) * 0.2 + 0.5
        scale = gamma / jnp.sqrt(var + eps)
        bias = beta - mean * scale
        return scale, bias

    w1 = jax.random.normal(ks[0], (in_channels, cint), jnp.float32) * 0.2
    s1, b1 = bn_fold(ks[1], ks[2], ks[3], ks[4], cint)
    w2 = jax.random.normal(ks[5], (3, 3, cint, cint), jnp.float32) * 0.2   # HWIO
    s2, b2 = bn_fold(ks[6], ks[7], ks[8], ks[9], cint)
    w3 = jax.random.normal(ks[10], (cint, cout), jnp.float32) * 0.2
    s3, b3 = bn_fold(ks[11], ks[0], ks[1], ks[2], cout)
    return (w1, s1, b1, w2, s2, b2, w3, s3, b3)


# ---------------------------------------------------------------------------
# Pure-JAX reference (for correctness check only)
# ---------------------------------------------------------------------------
def ref_forward(x_nchw, params):
    (w1, s1, b1, w2_hwio, s2, b2, w3, s3, b3) = params
    dn = ("NCHW", "OIHW", "NCHW")
    C = x_nchw.shape[1]
    Cint = w1.shape[1]

    def bn(x, s, b):
        return x * s.reshape(1, -1, 1, 1) + b.reshape(1, -1, 1, 1)

    w1_oihw = w1.T.reshape(Cint, C, 1, 1)
    h = jnp.maximum(bn(lax.conv_general_dilated(
        x_nchw, w1_oihw, (1, 1), "VALID", dimension_numbers=dn), s1, b1), 0.0)
    w2_oihw = jnp.transpose(w2_hwio, (3, 2, 0, 1))
    h = jnp.maximum(bn(lax.conv_general_dilated(
        h, w2_oihw, (2, 2), ((1, 1), (1, 1)), dimension_numbers=dn), s2, b2), 0.0)
    w3_oihw = w3.T.reshape(2 * C, Cint, 1, 1)
    h = bn(lax.conv_general_dilated(
        h, w3_oihw, (1, 1), "VALID", dimension_numbers=dn), s3, b3)
    mp = lax.reduce_window(x_nchw, -jnp.inf, lax.max,
                           (1, 1, 2, 2), (1, 1, 2, 2), "VALID")
    mp = jnp.concatenate([mp, mp], axis=1)
    return jnp.maximum(h + mp, 0.0)


# ---------------------------------------------------------------------------
if __name__ == "__main__":
    key = jax.random.PRNGKey(0)
    kx, kp = jax.random.split(key)

    N, C, H, W = 2, 16, 16, 16                  # internal=4, out=32, spatial/2
    x = jax.random.normal(kx, (N, C, H, W), jnp.float32)
    params = init_params(kp, C, internal_ratio=4)

    fwd = jax.jit(downsample_block_forward)
    out = jax.block_until_ready(fwd(x, params))
    assert out.shape == (N, 2 * C, H // 2, W // 2), out.shape

    ref = jax.block_until_ready(ref_forward(x, params))
    # bf16 MXU inputs (vs. the f32 XLA conv reference) leave ~1e-2 level
    # rounding noise; real indexing/tap bugs show up as O(0.3+) errors, so
    # this tolerance still cleanly separates the two.
    max_err = float(jnp.max(jnp.abs(out - ref)))
    assert jnp.allclose(out, ref, rtol=5e-2, atol=8e-2), max_err

    print("KERNEL_OK")
</pallas_src>

<mosaic_0001>
module attributes {stable_mosaic.version = 11 : i64} {
  func.func @_fused_downsample_kernel(%arg0: i32, %arg1: memref<1x256x16xbf16, #tpu.memory_space<vmem>>, %arg2: memref<16x4xbf16, #tpu.memory_space<vmem>>, %arg3: memref<1x4xf32, #tpu.memory_space<vmem>>, %arg4: memref<36x4xbf16, #tpu.memory_space<vmem>>, %arg5: memref<1x4xf32, #tpu.memory_space<vmem>>, %arg6: memref<4x32xbf16, #tpu.memory_space<vmem>>, %arg7: memref<1x32xf32, #tpu.memory_space<vmem>>, %arg8: memref<1x64x32xf32, #tpu.memory_space<vmem>>, %arg9: memref<64x36xbf16, #tpu.memory_space<vmem>>, %arg10: memref<64x32xf32, #tpu.memory_space<vmem>>) attributes {dimension_semantics = [#tpu.dimension_semantics<parallel>], iteration_bounds = array<i64: 2>, scalar_prefetch = 0 : i64, scratch_operands = 2 : i64, tpu.core_type = #tpu.core_type<tc>, window_params = [{transform_indices = @transform_0, window_bounds = array<i64: 1, 256, 16>}, {pipeline_mode = #tpu.pipeline_mode<synchronous>, transform_indices = @transform_1, window_bounds = array<i64: 16, 4>}, {pipeline_mode = #tpu.pipeline_mode<synchronous>, transform_indices = @transform_2, window_bounds = array<i64: 1, 4>}, {pipeline_mode = #tpu.pipeline_mode<synchronous>, transform_indices = @transform_3, window_bounds = array<i64: 36, 4>}, {pipeline_mode = #tpu.pipeline_mode<synchronous>, transform_indices = @transform_4, window_bounds = array<i64: 1, 4>}, {pipeline_mode = #tpu.pipeline_mode<synchronous>, transform_indices = @transform_5, window_bounds = array<i64: 4, 32>}, {pipeline_mode = #tpu.pipeline_mode<synchronous>, transform_indices = @transform_6, window_bounds = array<i64: 1, 32>}, {transform_indices = @transform_7, window_bounds = array<i64: 1, 64, 32>}]} {
    %c0 = arith.constant 0 : index
    %c0_0 = arith.constant 0 : index
    %c0_1 = arith.constant 0 : index
    %0 = vector.load %arg1[%c0, %c0_0, %c0_1] : memref<1x256x16xbf16, #tpu.memory_space<vmem>>, vector<1x256x16xbf16>
    %1 = vector.shape_cast %0 : vector<1x256x16xbf16> to vector<256x16xbf16>
    %2 = vector.extract_strided_slice %1 {offsets = [0, 0], sizes = [64, 16], strides = [1, 1]} : vector<256x16xbf16> to vector<64x16xbf16>
    %3 = vector.extract_strided_slice %1 {offsets = [64, 0], sizes = [64, 16], strides = [1, 1]} : vector<256x16xbf16> to vector<64x16xbf16>
    %4 = arith.maximumf %2, %3 : vector<64x16xbf16>
    %5 = vector.extract_strided_slice %1 {offsets = [128, 0], sizes = [64, 16], strides = [1, 1]} : vector<256x16xbf16> to vector<64x16xbf16>
    %6 = vector.extract_strided_slice %1 {offsets = [192, 0], sizes = [64, 16], strides = [1, 1]} : vector<256x16xbf16> to vector<64x16xbf16>
    %7 = arith.maximumf %5, %6 : vector<64x16xbf16>
    %8 = arith.maximumf %4, %7 : vector<64x16xbf16>
    %9 = arith.extf %8 : vector<64x16xbf16> to vector<64x16xf32>
    %c0_2 = arith.constant 0 : index
    %c0_3 = arith.constant 0 : index
    %10 = vector.load %arg10[%c0_2, %c0_3] : memref<64x32xf32, #tpu.memory_space<vmem>>, vector<64x16xf32>
    tpu.vector_store %arg10[%c0_2, %c0_3], %9 {strides = array<i32>} : memref<64x32xf32, #tpu.memory_space<vmem>>, vector<64x16xf32>,
    %c0_4 = arith.constant 0 : index
    %c16 = arith.constant 16 : index
    %11 = vector.load %arg10[%c0_4, %c16] : memref<64x32xf32, #tpu.memory_space<vmem>>, vector<64x16xf32>
    tpu.vector_store %arg10[%c0_4, %c16], %9 {strides = array<i32>} : memref<64x32xf32, #tpu.memory_space<vmem>>, vector<64x16xf32>,
    %c0_5 = arith.constant 0 : index
    %c0_6 = arith.constant 0 : index
    %12 = vector.load %arg2[%c0_5, %c0_6] : memref<16x4xbf16, #tpu.memory_space<vmem>>, vector<16x4xbf16>
    %cst = arith.constant dense<0.000000e+00> : vector<256x4xf32>
    %13 = tpu.matmul %1, %12, %cst {dimension_numbers = #tpu.dot_dimension_numbers<[1], [0], [0], [1], [0, 0, 1, 1], [], []>} : vector<256x16xbf16>, vector<16x4xbf16>, vector<256x4xf32> -> vector<256x4xf32>
    %c0_7 = arith.constant 0 : index
    %c0_8 = arith.constant 0 : index
    %14 = vector.load %arg3[%c0_7, %c0_8] : memref<1x4xf32, #tpu.memory_space<vmem>>, vector<1x4xf32>
    %15 = vector.broadcast %14 : vector<1x4xf32> to vector<256x4xf32>
    %16 = arith.addf %13, %15 : vector<256x4xf32>
    %cst_9 = arith.constant 0.000000e+00 : f32
    %17 = vector.broadcast %cst_9 : f32 to vector<256x4xf32>
    %18 = arith.maximumf %16, %17 : vector<256x4xf32>
    %19 = tpu.iota {dimensions = array<i32: 0>} : vector<64x1xi32>
    %c8_i32 = arith.constant 8 : i32
    %c0_i32 = arith.constant 0 : i32
    %20 = arith.cmpi eq, %c8_i32, %c0_i32 : i32
    %c1_i32 = arith.constant 1 : i32
    %21 = arith.select %20, %c1_i32, %c8_i32 : i32
    %22 = vector.broadcast %21 : i32 to vector<64x1xi32>
    %23 = arith.remsi %19, %22 : vector<64x1xi32>
    %c0_i32_10 = arith.constant 0 : i32
    %24 = vector.broadcast %c0_i32_10 : i32 to vector<64x1xi32>
    %25 = arith.cmpi ne, %23, %24 : vector<64x1xi32>
    %c0_i32_11 = arith.constant 0 : i32
    %26 = vector.broadcast %c0_i32_11 : i32 to vector<64x1xi32>
    %27 = arith.cmpi slt, %23, %26 : vector<64x1xi32>
    %c0_i32_12 = arith.constant 0 : i32
    %28 = arith.cmpi slt, %21, %c0_i32_12 : i32
    %29 = vector.broadcast %28 : i1 to vector<64x1xi1>
    %30 = vector.broadcast %29 : vector<64x1xi1> to vector<64x1xi1>
    %31 = arith.xori %27, %30 : vector<64x1xi1>
    %32 = arith.andi %31, %25 : vector<64x1xi1>
    %33 = vector.broadcast %21 : i32 to vector<64x1xi32>
    %34 = arith.addi %23, %33 : vector<64x1xi32>
    %35 = arith.select %32, %34, %23 : vector<64x1xi1>, vector<64x1xi32>
    %c0_i32_13 = arith.constant 0 : i32
    %36 = vector.broadcast %c0_i32_13 : i32 to vector<64x1xi32>
    %37 = arith.cmpi ne, %35, %36 : vector<64x1xi32>
    %38 = arith.extui %37 : vector<64x1xi1> to vector<64x1xi32>
    %39 = arith.sitofp %38 : vector<64x1xi32> to vector<64x1xf32>
    %c8_i32_14 = arith.constant 8 : i32
    %40 = vector.broadcast %c8_i32_14 : i32 to vector<64x1xi32>
    %41 = arith.cmpi sge, %19, %40 : vector<64x1xi32>
    %42 = arith.extui %41 : vector<64x1xi1> to vector<64x1xi32>
    %43 = arith.sitofp %42 : vector<64x1xi32> to vector<64x1xf32>
    %44 = arith.mulf %43, %39 : vector<64x1xf32>
    %45 = vector.extract_strided_slice %18 {offsets = [183, 0], sizes = [64, 4], strides = [1, 1]} : vector<256x4xf32> to vector<64x4xf32>
    %46 = vector.broadcast %44 : vector<64x1xf32> to vector<64x4xf32>
    %47 = arith.mulf %45, %46 : vector<64x4xf32>
    %48 = arith.truncf %47 : vector<64x4xf32> to vector<64x4xbf16>
    %c0_15 = arith.constant 0 : index
    %c0_16 = arith.constant 0 : index
    %49 = vector.load %arg9[%c0_15, %c0_16] : memref<64x36xbf16, #tpu.memory_space<vmem>>, vector<64x4xbf16>
    tpu.vector_store %arg9[%c0_15, %c0_16], %48 {strides = array<i32>} : memref<64x36xbf16, #tpu.memory_space<vmem>>, vector<64x4xbf16>,
    %50 = vector.extract_strided_slice %18 {offsets = [120, 0], sizes = [64, 4], strides = [1, 1]} : vector<256x4xf32> to vector<64x4xf32>
    %51 = vector.broadcast %43 : vector<64x1xf32> to vector<64x4xf32>
    %52 = arith.mulf %50, %51 : vector<64x4xf32>
    %53 = arith.truncf %52 : vector<64x4xf32> to vector<64x4xbf16>
    %c0_17 = arith.constant 0 : index
    %c4 = arith.constant 4 : index
    %54 = vector.load %arg9[%c0_17, %c4] : memref<64x36xbf16, #tpu.memory_space<vmem>>, vector<64x4xbf16>
    tpu.vector_store %arg9[%c0_17, %c4], %53 {strides = array<i32>} : memref<64x36xbf16, #tpu.memory_space<vmem>>, vector<64x4xbf16>,
    %55 = vector.extract_strided_slice %18 {offsets = [184, 0], sizes = [64, 4], strides = [1, 1]} : vector<256x4xf32> to vector<64x4xf32>
    %56 = vector.broadcast %43 : vector<64x1xf32> to vector<64x4xf32>
    %57 = arith.mulf %55, %56 : vector<64x4xf32>
    %58 = arith.truncf %57 : vector<64x4xf32> to vector<64x4xbf16>
    %c0_18 = arith.constant 0 : index
    %c8 = arith.constant 8 : index
    %59 = vector.load %arg9[%c0_18, %c8] : memref<64x36xbf16, #tpu.memory_space<vmem>>, vector<64x4xbf16>
    tpu.vector_store %arg9[%c0_18, %c8], %58 {strides = array<i32>} : memref<64x36xbf16, #tpu.memory_space<vmem>>, vector<64x4xbf16>,
    %60 = vector.extract_strided_slice %18 {offsets = [63, 0], sizes = [64, 4], strides = [1, 1]} : vector<256x4xf32> to vector<64x4xf32>
    %61 = vector.broadcast %39 : vector<64x1xf32> to vector<64x4xf32>
    %62 = arith.mulf %60, %61 : vector<64x4xf32>
    %63 = arith.truncf %62 : vector<64x4xf32> to vector<64x4xbf16>
    %c0_19 = arith.constant 0 : index
    %c12 = arith.constant 12 : index
    %64 = vector.load %arg9[%c0_19, %c12] : memref<64x36xbf16, #tpu.memory_space<vmem>>, vector<64x4xbf16>
    tpu.vector_store %arg9[%c0_19, %c12], %63 {strides = array<i32>} : memref<64x36xbf16, #tpu.memory_space<vmem>>, vector<64x4xbf16>,
    %65 = vector.extract_strided_slice %18 {offsets = [0, 0], sizes = [64, 4], strides = [1, 1]} : vector<256x4xf32> to vector<64x4xf32>
    %66 = arith.truncf %65 : vector<64x4xf32> to vector<64x4xbf16>
    %c0_20 = arith.constant 0 : index
    %c16_21 = arith.constant 16 : index
    %67 = vector.load %arg9[%c0_20, %c16_21] : memref<64x36xbf16, #tpu.memory_space<vmem>>, vector<64x4xbf16>
    tpu.vector_store %arg9[%c0_20, %c16_21], %66 {strides = array<i32>} : memref<64x36xbf16, #tpu.memory_space<vmem>>, vector<64x4xbf16>,
    %68 = vector.extract_strided_slice %18 {offsets = [64, 0], sizes = [64, 4], strides = [1, 1]} : vector<256x4xf32> to vector<64x4xf32>
    %69 = arith.truncf %68 : vector<64x4xf32> to vector<64x4xbf16>
    %c0_22 = arith.constant 0 : index
    %c20 = arith.constant 20 : index
    %70 = vector.load %arg9[%c0_22, %c20] : memref<64x36xbf16, #tpu.memory_space<vmem>>, vector<64x4xbf16>
    tpu.vector_store %arg9[%c0_22, %c20], %69 {strides = array<i32>} : memref<64x36xbf16, #tpu.memory_space<vmem>>, vector<64x4xbf16>,
    %71 = vector.extract_strided_slice %18 {offsets = [191, 0], sizes = [64, 4], strides = [1, 1]} : vector<256x4xf32> to vector<64x4xf32>
    %72 = vector.broadcast %39 : vector<64x1xf32> to vector<64x4xf32>
    %73 = arith.mulf %71, %72 : vector<64x4xf32>
    %74 = arith.truncf %73 : vector<64x4xf32> to vector<64x4xbf16>
    %c0_23 = arith.constant 0 : index
    %c24 = arith.constant 24 : index
    %75 = vector.load %arg9[%c0_23, %c24] : memref<64x36xbf16, #tpu.memory_space<vmem>>, vector<64x4xbf16>
    tpu.vector_store %arg9[%c0_23, %c24], %74 {strides = array<i32>} : memref<64x36xbf16, #tpu.memory_space<vmem>>, vector<64x4xbf16>,
    %76 = vector.extract_strided_slice %18 {offsets = [128, 0], sizes = [64, 4], strides = [1, 1]} : vector<256x4xf32> to vector<64x4xf32>
    %77 = arith.truncf %76 : vector<64x4xf32> to vector<64x4xbf16>
    %c0_24 = arith.constant 0 : index
    %c28 = arith.constant 28 : index
    %78 = vector.load %arg9[%c0_24, %c28] : memref<64x36xbf16, #tpu.memory_space<vmem>>, vector<64x4xbf16>
    tpu.vector_store %arg9[%c0_24, %c28], %77 {strides = array<i32>} : memref<64x36xbf16, #tpu.memory_space<vmem>>, vector<64x4xbf16>,
    %79 = vector.extract_strided_slice %18 {offsets = [192, 0], sizes = [64, 4], strides = [1, 1]} : vector<256x4xf32> to vector<64x4xf32>
    %80 = arith.truncf %79 : vector<64x4xf32> to vector<64x4xbf16>
    %c0_25 = arith.constant 0 : index
    %c32 = arith.constant 32 : index
    %81 = vector.load %arg9[%c0_25, %c32] : memref<64x36xbf16, #tpu.memory_space<vmem>>, vector<64x4xbf16>
    tpu.vector_store %arg9[%c0_25, %c32], %80 {strides = array<i32>} : memref<64x36xbf16, #tpu.memory_space<vmem>>, vector<64x4xbf16>,
    %c0_26 = arith.constant 0 : index
    %c0_27 = arith.constant 0 : index
    %82 = vector.load %arg9[%c0_26, %c0_27] : memref<64x36xbf16, #tpu.memory_space<vmem>>, vector<64x36xbf16>
    %c0_28 = arith.constant 0 : index
    %c0_29 = arith.constant 0 : index
    %83 = vector.load %arg4[%c0_28, %c0_29] : memref<36x4xbf16, #tpu.memory_space<vmem>>, vector<36x4xbf16>
    %cst_30 = arith.constant dense<0.000000e+00> : vector<64x4xf32>
    %84 = tpu.matmul %82, %83, %cst_30 {dimension_numbers = #tpu.dot_dimension_numbers<[1], [0], [0], [1], [0, 0, 1, 1], [], []>} : vector<64x36xbf16>, vector<36x4xbf16>, vector<64x4xf32> -> vector<64x4xf32>
    %c0_31 = arith.constant 0 : index
    %c0_32 = arith.constant 0 : index
    %85 = vector.load %arg5[%c0_31, %c0_32] : memref<1x4xf32, #tpu.memory_space<vmem>>, vector<1x4xf32>
    %86 = vector.broadcast %85 : vector<1x4xf32> to vector<64x4xf32>
    %87 = arith.addf %84, %86 : vector<64x4xf32>
    %cst_33 = arith.constant 0.000000e+00 : f32
    %88 = vector.broadcast %cst_33 : f32 to vector<64x4xf32>
    %89 = arith.maximumf %87, %88 : vector<64x4xf32>
    %90 = arith.truncf %89 : vector<64x4xf32> to vector<64x4xbf16>
    %c0_34 = arith.constant 0 : index
    %c0_35 = arith.constant 0 : index
    %91 = vector.load %arg6[%c0_34, %c0_35] : memref<4x32xbf16, #tpu.memory_space<vmem>>, vector<4x32xbf16>
    %cst_36 = arith.constant dense<0.000000e+00> : vector<64x32xf32>
    %92 = tpu.matmul %90, %91, %cst_36 {dimension_numbers = #tpu.dot_dimension_numbers<[1], [0], [0], [1], [0, 0, 1, 1], [], []>} : vector<64x4xbf16>, vector<4x32xbf16>, vector<64x32xf32> -> vector<64x32xf32>
    %c0_37 = arith.constant 0 : index
    %c0_38 = arith.constant 0 : index
    %93 = vector.load %arg7[%c0_37, %c0_38] : memref<1x32xf32, #tpu.memory_space<vmem>>, vector<1x32xf32>
    %94 = vector.broadcast %93 : vector<1x32xf32> to vector<64x32xf32>
    %95 = arith.addf %92, %94 : vector<64x32xf32>
    %c0_39 = arith.constant 0 : index
    %c0_40 = arith.constant 0 : index
    %96 = vector.load %arg10[%c0_39, %c0_40] : memref<64x32xf32, #tpu.memory_space<vmem>>, vector<64x32xf32>
    %97 = arith.addf %95, %96 : vector<64x32xf32>
    %cst_41 = arith.constant 0.000000e+00 : f32
    %98 = vector.broadcast %cst_41 : f32 to vector<64x32xf32>
    %99 = arith.maximumf %97, %98 : vector<64x32xf32>
    %c0_42 = arith.constant 0 : index
    %c0_43 = arith.constant 0 : index
    %c0_44 = arith.constant 0 : index
    %100 = vector.load %arg8[%c0_42, %c0_43, %c0_44] : memref<1x64x32xf32, #tpu.memory_space<vmem>>, vector<1x64x32xf32>
    %101 = vector.shape_cast %100 : vector<1x64x32xf32> to vector<64x32xf32>
    %102 = vector.shape_cast %99 : vector<64x32xf32> to vector<1x64x32xf32>
    tpu.vector_store %arg8[%c0_42, %c0_43, %c0_44], %102 {strides = array<i32>} : memref<1x64x32xf32, #tpu.memory_space<vmem>>, vector<1x64x32xf32>,
    return
  }
  func.func @transform_0(%arg0: i32) -> (i32, i32, i32) {
    %c0_i32 = arith.constant 0 : i32
    %c0_i32_0 = arith.constant 0 : i32
    %c0_i32_1 = arith.constant 0 : i32
    return %arg0, %c0_i32, %c0_i32_0 : i32, i32, i32
  }
  func.func @transform_1(%arg0: i32) -> (i32, i32) {
    %c0_i32 = arith.constant 0 : i32
    %c0_i32_0 = arith.constant 0 : i32
    %c0_i32_1 = arith.constant 0 : i32
    return %c0_i32, %c0_i32_0 : i32, i32
  }
  func.func @transform_2(%arg0: i32) -> (i32, i32) {
    %c0_i32 = arith.constant 0 : i32
    %c0_i32_0 = arith.constant 0 : i32
    %c0_i32_1 = arith.constant 0 : i32
    return %c0_i32, %c0_i32_0 : i32, i32
  }
  func.func @transform_3(%arg0: i32) -> (i32, i32) {
    %c0_i32 = arith.constant 0 : i32
    %c0_i32_0 = arith.constant 0 : i32
    %c0_i32_1 = arith.constant 0 : i32
    return %c0_i32, %c0_i32_0 : i32, i32
  }
  func.func @transform_4(%arg0: i32) -> (i32, i32) {
    %c0_i32 = arith.constant 0 : i32
    %c0_i32_0 = arith.constant 0 : i32
    %c0_i32_1 = arith.constant 0 : i32
    return %c0_i32, %c0_i32_0 : i32, i32
  }
  func.func @transform_5(%arg0: i32) -> (i32, i32) {
    %c0_i32 = arith.constant 0 : i32
    %c0_i32_0 = arith.constant 0 : i32
    %c0_i32_1 = arith.constant 0 : i32
    return %c0_i32, %c0_i32_0 : i32, i32
  }
  func.func @transform_6(%arg0: i32) -> (i32, i32) {
    %c0_i32 = arith.constant 0 : i32
    %c0_i32_0 = arith.constant 0 : i32
    %c0_i32_1 = arith.constant 0 : i32
    return %c0_i32, %c0_i32_0 : i32, i32
  }
  func.func @transform_7(%arg0: i32) -> (i32, i32, i32) {
    %c0_i32 = arith.constant 0 : i32
    %c0_i32_0 = arith.constant 0 : i32
    %c0_i32_1 = arith.constant 0 : i32
    return %arg0, %c0_i32, %c0_i32_0 : i32, i32, i32
  }
}

</mosaic_0001>

<llo_original>
// kernel: downsample_block_forward.1
$region0: #{downsample_block_forward.1}
  #allocation0 [shape = 'u32[]', space=smem, size = 0x4, offset = 0x4, fixed_abs, tag = 'smem constant byte address 0x4 - core index']
  #allocation1 [shape = 'u32[144,128]{1,0:T(1,128)}', space=vmem, size = 0x12000, scoped, tag = 'internal scratch']
  #allocation2 [shape = 'bf16[64,36]{1,0:T(16,128)(2,1)}', space=vmem, size = 0x4000, scoped, tag = 'scratch operand']
  #allocation3 [shape = 'f32[64,32]{1,0:T(8,128)}', space=vmem, size = 0x8000, scoped, tag = 'scratch operand']
  %s0 = inlined_call_operand.vmem [shape: bf16[2,256,16], index: 0, kind: input, shape index: {}]
  %s1 = inlined_call_operand.vmem [shape: bf16[16,4], index: 1, kind: input, shape index: {}]
  %s2 = inlined_call_operand.vmem [shape: f32[1,4], index: 2, kind: input, shape index: {}]
  %s3 = inlined_call_operand.vmem [shape: bf16[36,4], index: 3, kind: input, shape index: {}]
  %s4 = inlined_call_operand.vmem [shape: f32[1,4], index: 4, kind: input, shape index: {}]
  %s5 = inlined_call_operand.vmem [shape: bf16[4,32], index: 5, kind: input, shape index: {}]
  %s6 = inlined_call_operand.vmem [shape: f32[1,32], index: 6, kind: input, shape index: {}]
  %s7 = inlined_call_operand.hbm [shape: f32[2,64,32], index: 7, kind: output, shape index: {}]
  %s8 = sld [smem:[#allocation0]]
  $region61: #{downsample_block_forward.1} parent=0
    _
  %s10 = ssub.s32 1, %s8
  %s11 = scalar_select 0, %s10, %s8
  $region1: #{downsample_block_forward.1} parent=0
    #allocation4 [shape = 'u8[65536]{0}', space=vmem, size = 0x10000, scoped, tag = 'output window, operand 0']
    #allocation5 [shape = 's32[2]{0}', space=sflag, size = 0x8, scoped, tag = 'scoped memory for downsample_block_forward.1']
    %12 = vsyncpa [#allocation5], 0
    %s13 = scalar_lea.sflag [#allocation5], 1
    %14 = vsyncpa %s13, 0
    loop: start=0, step=1, limit=4
    $region2: #{downsample_block_forward.1} parent=1 // loop_pre_header
      _
    $region3: #{downsample_block_forward.1} parent=1 // loop_header
      %s16 = sphi 0, %s20
      %p17 = scmp.ge.s32.totalorder %s16, 4
      %s26 = sphi 0, %s28
      %s29 = sphi 0, %s26
      %s30 = sphi 0, %s29
      %s46 = sphi 0, %s30
      %s50 = sphi 0, %s50
      %s52 = sphi 0, %s50
      %s53 = sphi 0, %s52
      %s67 = sphi 0, %s53
      %s71 = sphi 0, %s71
      %s73 = sphi 0, %s71
      %s74 = sphi 0, %s73
      %s88 = sphi 0, %s74
      %s92 = sphi 0, %s92
      %s94 = sphi 0, %s92
      %s95 = sphi 0, %s94
      %s109 = sphi 0, %s95
      %s113 = sphi 0, %s113
      %s115 = sphi 0, %s113
      %s116 = sphi 0, %s115
      %s130 = sphi 0, %s116
      %s134 = sphi 0, %s134
      %s136 = sphi 0, %s134
      %s137 = sphi 0, %s136
      %s151 = sphi 0, %s137
      %s155 = sphi 0, %s155
      %s157 = sphi 0, %s155
      %s158 = sphi 0, %s157
      %s172 = sphi 0, %s158
      %s178 = sphi 0, %s180
      %s181 = sphi 0, %s178
      %s182 = sphi 0, %s181
      %s198 = sphi 0, %s182
    $region4: #{downsample_block_forward.1} parent=1 // loop_header_branch
      %19 = sbr.rel (%p17) target = $region8
    $region5: #{downsample_block_forward.1} parent=1 // loop_body
      %s21 = ssub.s32 %s16, 1
      %s22 = ssub.s32 %s16, 2
      %s23 = sadd.s32 %s16, 1
      %s24 = ssub.s32 %s16, %s23
      %p25 = scmp.eq.s32.totalorder %s24, 0
      %s27 = sadd.s32 %s26, 1
      %s28 = scalar_select %p25, %s26, %s27
      %p31 = pneg %p25
      %p32 = scmp.eq.s32.totalorder %s16, 1
      %p33 = por %p31, %p32
      %p34 = scmp.ne.s32.totalorder %s26, %s29
      %p35 = scmp.eq.s32.totalorder %s16, 0
      %p36 = por %p34, %p35
      %p37 = scmp.ne.s32.totalorder %s26, %s29
      %p38 = scmp.eq.s32.totalorder %s21, 1
      %p39 = por %p37, %p38
      %p40 = scmp.ne.s32.totalorder %s29, %s30
      %p41 = scmp.eq.s32.totalorder %s21, 0
      %p42 = por %p40, %p41
      %p43 = scmp.ne.s32.totalorder %s29, %s30
      %p44 = scmp.eq.s32.totalorder %s22, 1
      %p45 = por %p43, %p44
      %p47 = scmp.ne.s32.totalorder %s30, %s46
      %p48 = scmp.eq.s32.totalorder %s22, 0
      %p49 = por %p47, %p48
      %s51 = sadd.s32 %s50, 1
      %p54 = scmp.eq.s32.totalorder %s16, 1
      %p55 = scmp.ne.s32.totalorder %s50, %s52
      %p56 = scmp.eq.s32.totalorder %s16, 0
      %p57 = por %p55, %p56
      %p58 = scmp.ne.s32.totalorder %s50, %s52
      %p59 = scmp.eq.s32.totalorder %s21, 1
      %p60 = por %p58, %p59
      %p61 = scmp.ne.s32.totalorder %s52, %s53
      %p62 = scmp.eq.s32.totalorder %s21, 0
      %p63 = por %p61, %p62
      %p64 = scmp.ne.s32.totalorder %s52, %s53
      %p65 = scmp.eq.s32.totalorder %s22, 1
      %p66 = por %p64, %p65
      %p68 = scmp.ne.s32.totalorder %s53, %s67
      %p69 = scmp.eq.s32.totalorder %s22, 0
      %p70 = por %p68, %p69
      %s72 = sadd.s32 %s71, 1
      %p75 = scmp.eq.s32.totalorder %s16, 1
      %p76 = scmp.ne.s32.totalorder %s71, %s73
      %p77 = scmp.eq.s32.totalorder %s16, 0
      %p78 = por %p76, %p77
      %p79 = scmp.ne.s32.totalorder %s71, %s73
      %p80 = scmp.eq.s32.totalorder %s21, 1
      %p81 = por %p79, %p80
      %p82 = scmp.ne.s32.totalorder %s73, %s74
      %p83 = scmp.eq.s32.totalorder %s21, 0
      %p84 = por %p82, %p83
      %p85 = scmp.ne.s32.totalorder %s73, %s74
      %p86 = scmp.eq.s32.totalorder %s22, 1
      %p87 = por %p85, %p86
      %p89 = scmp.ne.s32.totalorder %s74, %s88
      %p90 = scmp.eq.s32.totalorder %s22, 0
      %p91 = por %p89, %p90
      %s93 = sadd.s32 %s92, 1
      %p96 = scmp.eq.s32.totalorder %s16, 1
      %p97 = scmp.ne.s32.totalorder %s92, %s94
      %p98 = scmp.eq.s32.totalorder %s16, 0
      %p99 = por %p97, %p98
      %p100 = scmp.ne.s32.totalorder %s92, %s94
      %p101 = scmp.eq.s32.totalorder %s21, 1
      %p102 = por %p100, %p101
      %p103 = scmp.ne.s32.totalorder %s94, %s95
      %p104 = scmp.eq.s32.totalorder %s21, 0
      %p105 = por %p103, %p104
      %p106 = scmp.ne.s32.totalorder %s94, %s95
      %p107 = scmp.eq.s32.totalorder %s22, 1
      %p108 = por %p106, %p107
      %p110 = scmp.ne.s32.totalorder %s95, %s109
      %p111 = scmp.eq.s32.totalorder %s22, 0
      %p112 = por %p110, %p111
      %s114 = sadd.s32 %s113, 1
      %p117 = scmp.eq.s32.totalorder %s16, 1
      %p118 = scmp.ne.s32.totalorder %s113, %s115
      %p119 = scmp.eq.s32.totalorder %s16, 0
      %p120 = por %p118, %p119
      %p121 = scmp.ne.s32.totalorder %s113, %s115
      %p122 = scmp.eq.s32.totalorder %s21, 1
      %p123 = por %p121, %p122
      %p124 = scmp.ne.s32.totalorder %s115, %s116
      %p125 = scmp.eq.s32.totalorder %s21, 0
      %p126 = por %p124, %p125
      %p127 = scmp.ne.s32.totalorder %s115, %s116
      %p128 = scmp.eq.s32.totalorder %s22, 1
      %p129 = por %p127, %p128
      %p131 = scmp.ne.s32.totalorder %s116, %s130
      %p132 = scmp.eq.s32.totalorder %s22, 0
      %p133 = por %p131, %p132
      %s135 = sadd.s32 %s134, 1
      %p138 = scmp.eq.s32.totalorder %s16, 1
      %p139 = scmp.ne.s32.totalorder %s134, %s136
      %p140 = scmp.eq.s32.totalorder %s16, 0
      %p141 = por %p139, %p140
      %p142 = scmp.ne.s32.totalorder %s134, %s136
      %p143 = scmp.eq.s32.totalorder %s21, 1
      %p144 = por %p142, %p143
      %p145 = scmp.ne.s32.totalorder %s136, %s137
      %p146 = scmp.eq.s32.totalorder %s21, 0
      %p147 = por %p145, %p146
      %p148 = scmp.ne.s32.totalorder %s136, %s137
      %p149 = scmp.eq.s32.totalorder %s22, 1
      %p150 = por %p148, %p149
      %p152 = scmp.ne.s32.totalorder %s137, %s151
      %p153 = scmp.eq.s32.totalorder %s22, 0
      %p154 = por %p152, %p153
      %s156 = sadd.s32 %s155, 1
      %p159 = scmp.eq.s32.totalorder %s16, 1
      %p160 = scmp.ne.s32.totalorder %s155, %s157
      %p161 = scmp.eq.s32.totalorder %s16, 0
      %p162 = por %p160, %p161
      %p163 = scmp.ne.s32.totalorder %s155, %s157
      %p164 = scmp.eq.s32.totalorder %s21, 1
      %p165 = por %p163, %p164
      %p166 = scmp.ne.s32.totalorder %s157, %s158
      %p167 = scmp.eq.s32.totalorder %s21, 0
      %p168 = por %p166, %p167
      %p169 = scmp.ne.s32.totalorder %s157, %s158
      %p170 = scmp.eq.s32.totalorder %s22, 1
      %p171 = por %p169, %p170
      %p173 = scmp.ne.s32.totalorder %s158, %s172
      %p174 = scmp.eq.s32.totalorder %s22, 0
      %p175 = por %p173, %p174
      %s176 = ssub.s32 %s16, %s23
      %p177 = scmp.eq.s32.totalorder %s176, 0
      %s179 = sadd.s32 %s178, 1
      %s180 = scalar_select %p177, %s178, %s179
      %p183 = pneg %p177
      %p184 = scmp.eq.s32.totalorder %s16, 1
      %p185 = por %p183, %p184
      %p186 = scmp.ne.s32.totalorder %s178, %s181
      %p187 = scmp.eq.s32.totalorder %s16, 0
      %p188 = por %p186, %p187
      %p189 = scmp.ne.s32.totalorder %s178, %s181
      %p190 = scmp.eq.s32.totalorder %s21, 1
      %p191 = por %p189, %p190
      %p192 = scmp.ne.s32.totalorder %s181, %s182
      %p193 = scmp.eq.s32.totalorder %s21, 0
      %p194 = por %p192, %p193
      %p195 = scmp.ne.s32.totalorder %s181, %s182
      %p196 = scmp.eq.s32.totalorder %s22, 1
      %p197 = por %p195, %p196
      %p199 = scmp.ne.s32.totalorder %s182, %s198
      %p200 = scmp.eq.s32.totalorder %s22, 0
      %p201 = por %p199, %p200
      %p202 = scmp.le.s32.totalorder 1, %s16
      %p203 = scmp.lt.s32.totalorder %s16, 3
      %p204 = pnand %p202, %p203
      %p205 = pneg %p204
      // Predicated region
      $region9: #{downsample_block_forward.1} parent=5 // pred_check
        _
      $region10: #{downsample_block_forward.1} parent=5 // pred_check_branch
        %207 = sbr.rel (%p204) target = $region12
      $region11: #{downsample_block_forward.1} parent=5 // pred_region
        %s208 = ssub.s32 %s16, 1
        // Predicated region
        $region13: #{downsample_block_forward.1} parent=11 // pred_check
          %p209 = pneg %p63
        $region14: #{downsample_block_forward.1} parent=11 // pred_check_branch
          %211 = sbr.rel (%p209) target = $region16
        $region15: #{downsample_block_forward.1} parent=11 // pred_region
          _
        $region16: #{downsample_block_forward.1} parent=11 // pred_fallthru
          _
        // Predicated region
        $region17: #{downsample_block_forward.1} parent=11 // pred_check
          %p212 = pneg %p84
        $region18: #{downsample_block_forward.1} parent=11 // pred_check_branch
          %214 = sbr.rel (%p212) target = $region20
        $region19: #{downsample_block_forward.1} parent=11 // pred_region
          _
        $region20: #{downsample_block_forward.1} parent=11 // pred_fallthru
          _
        // Predicated region
        $region21: #{downsample_block_forward.1} parent=11 // pred_check
          %p215 = pneg %p105
        $region22: #{downsample_block_forward.1} parent=11 // pred_check_branch
          %217 = sbr.rel (%p215) target = $region24
        $region23: #{downsample_block_forward.1} parent=11 // pred_region
          _
        $region24: #{downsample_block_forward.1} parent=11 // pred_fallthru
          _
        // Predicated region
        $region25: #{downsample_block_forward.1} parent=11 // pred_check
          %p218 = pneg %p126
        $region26: #{downsample_block_forward.1} parent=11 // pred_check_branch
          %220 = sbr.rel (%p218) target = $region28
        $region27: #{downsample_block_forward.1} parent=11 // pred_region
          _
        $region28: #{downsample_block_forward.1} parent=11 // pred_fallthru
          _
        // Predicated region
        $region29: #{downsample_block_forward.1} parent=11 // pred_check
          %p221 = pneg %p147
        $region30: #{downsample_block_forward.1} parent=11 // pred_check_branch
          %223 = sbr.rel (%p221) target = $region32
        $region31: #{downsample_block_forward.1} parent=11 // pred_region
          _
        $region32: #{downsample_block_forward.1} parent=11 // pred_fallthru
          _
        // Predicated region
        $region33: #{downsample_block_forward.1} parent=11 // pred_check
          %p224 = pneg %p168
        $region34: #{downsample_block_forward.1} parent=11 // pred_check_branch
          %226 = sbr.rel (%p224) target = $region36
        $region35: #{downsample_block_forward.1} parent=11 // pred_region
          _
        $region36: #{downsample_block_forward.1} parent=11 // pred_fallthru
          _
      $region12: #{downsample_block_forward.1} parent=5 // pred_fallthru
        _
      %p227 = scmp.lt.s32.totalorder %s16, 2
      // Predicated region
      $region37: #{downsample_block_forward.1} parent=5 // pred_check
        %p228 = pneg %p227
      $region38: #{downsample_block_forward.1} parent=5 // pred_check_branch
        %230 = sbr.rel (%p228) target = $region40
      $region39: #{downsample_block_forward.1} parent=5 // pred_region
        // Predicated region
        $region41: #{downsample_block_forward.1} parent=39 // pred_check
          %p231 = pneg %p36
        $region42: #{downsample_block_forward.1} parent=39 // pred_check_branch
          %233 = sbr.rel (%p231) target = $region44
        $region43: #{downsample_block_forward.1} parent=39 // pred_region
          %p234 = scmp.lt.s32.totalorder %s16, 1
          %s235 = scalar_select %p234, %s16, 1
          %s236 = smul.addr %s235, 32
          %s237 = smul.addr %s236, 4
          %s238 = scalar_lea.vmem %s0, %s237
        $region44: #{downsample_block_forward.1} parent=39 // pred_fallthru
          _
      $region40: #{downsample_block_forward.1} parent=5 // pred_fallthru
        _
      %p239 = scmp.le.s32.totalorder 1, %s16
      %p240 = scmp.lt.s32.totalorder %s16, 3
      %p241 = pnand %p239, %p240
      %p242 = pneg %p241
      // Predicated region
      $region45: #{downsample_block_forward.1} parent=5 // pred_check
        _
      $region46: #{downsample_block_forward.1} parent=5 // pred_check_branch
        %244 = sbr.rel (%p241) target = $region48
      $region47: #{downsample_block_forward.1} parent=5 // pred_region
        %s245 = ssub.s32 %s16, 1
        %p246 = scmp.lt.s32.totalorder %s21, 1
        %s247 = scalar_select %p246, %s21, 1
        %s248 = smul.addr %s247, 32
        %s249 = smul.addr %s248, 4
        %s250 = scalar_lea.vmem %s0, %s249
        %p251 = pneg %p42
        %p252 = pneg %p39
        %p253 = pneg %p63
        %p254 = pneg %p60
        %p255 = pneg %p84
        %p256 = pneg %p81
        %p257 = pneg %p105
        %p258 = pneg %p102
        %p259 = pneg %p126
        %p260 = pneg %p123
        %p261 = pneg %p147
        %p262 = pneg %p144
        %p263 = pneg %p168
        %p264 = pneg %p165
        %p265 = pneg %p194
        %p266 = pneg %p191
        %s267 = sand.u32 %s181, 1
        %s268 = scalar_lea.sflag [#allocation5], %s267
        %s269 = sand.u32 %s181, 1
        %s270 = smul.addr %s269, 64
        %s271 = scalar_lea.vmem [#allocation4], %s270
        %p272 = scmp.lt.s32.totalorder %s21, 1
        %s273 = scalar_select %p272, %s21, 1
        %s274 = smul.addr %s273, 32
        %s275 = smul.addr %s274, 4
        %s276 = scalar_lea.vmem %s0, %s275
        %v278 = vld [vmem:[%s276] sm:$0xf]
        %v279 = vld [vmem:[%s276 + $0x4] sm:$0xf]
        %v280 = vld [vmem:[%s276 + $0x8] sm:$0xf]
        %v281 = vld [vmem:[%s276 + $0xc] sm:$0xf]
        %v282 = vld [vmem:[%s276 + $0x10] sm:$0xf]
        %v283 = vld [vmem:[%s276 + $0x14] sm:$0xf]
        %v284 = vld [vmem:[%s276 + $0x18] sm:$0xf]
        %v285 = vld [vmem:[%s276 + $0x1c] sm:$0xf]
        %v286 = vld [vmem:[%s276 + $0x20] sm:$0xf]
        %v287 = vld [vmem:[%s276 + $0x24] sm:$0xf]
        %v288 = vld [vmem:[%s276 + $0x28] sm:$0xf]
        %v289 = vld [vmem:[%s276 + $0x2c] sm:$0xf]
        %v290 = vld [vmem:[%s276 + $0x30] sm:$0xf]
        %v291 = vld [vmem:[%s276 + $0x34] sm:$0xf]
        %v292 = vld [vmem:[%s276 + $0x38] sm:$0xf]
        %v293 = vld [vmem:[%s276 + $0x3c] sm:$0xf]
        %v294 = vld [vmem:[%s276 + $0x40] sm:$0xf]
        %v295 = vld [vmem:[%s276 + $0x44] sm:$0xf]
        %v296 = vld [vmem:[%s276 + $0x48] sm:$0xf]
        %v297 = vld [vmem:[%s276 + $0x4c] sm:$0xf]
        %v298 = vld [vmem:[%s276 + $0x50] sm:$0xf]
        %v299 = vld [vmem:[%s276 + $0x54] sm:$0xf]
        %v300 = vld [vmem:[%s276 + $0x58] sm:$0xf]
        %v301 = vld [vmem:[%s276 + $0x5c] sm:$0xf]
        %v302 = vld [vmem:[%s276 + $0x60] sm:$0xf]
        %v303 = vld [vmem:[%s276 + $0x64] sm:$0xf]
        %v304 = vld [vmem:[%s276 + $0x68] sm:$0xf]
        %v305 = vld [vmem:[%s276 + $0x6c] sm:$0xf]
        %v306 = vld [vmem:[%s276 + $0x70] sm:$0xf]
        %v307 = vld [vmem:[%s276 + $0x74] sm:$0xf]
        %v308 = vld [vmem:[%s276 + $0x78] sm:$0xf]
        %v309 = vld [vmem:[%s276 + $0x7c] sm:$0xf]
        %v310 = vmax.bf16 %v278, %v286
        %v311 = vmax.bf16 %v279, %v287
        %v312 = vmax.bf16 %v280, %v288
        %v313 = vmax.bf16 %v281, %v289
        %v314 = vmax.bf16 %v282, %v290
        %v315 = vmax.bf16 %v283, %v291
        %v316 = vmax.bf16 %v284, %v292
        %v317 = vmax.bf16 %v285, %v293
        %v318 = vmax.bf16 %v294, %v302
        %v319 = vmax.bf16 %v295, %v303
        %v320 = vmax.bf16 %v296, %v304
        %v321 = vmax.bf16 %v297, %v305
        %v322 = vmax.bf16 %v298, %v306
        %v323 = vmax.bf16 %v299, %v307
        %v324 = vmax.bf16 %v300, %v308
        %v325 = vmax.bf16 %v301, %v309
        %v326 = vmax.bf16 %v310, %v318
        %v327 = vmax.bf16 %v311, %v319
        %v328 = vmax.bf16 %v312, %v320
        %v329 = vmax.bf16 %v313, %v321
        %v330 = vmax.bf16 %v314, %v322
        %v331 = vmax.bf16 %v315, %v323
        %v332 = vmax.bf16 %v316, %v324
        %v333 = vmax.bf16 %v317, %v325
        %v334 = vunpack.c.l.bf16 %v326
        %v335 = vunpack.c.l.bf16 %v327
        %v336 = vunpack.c.l.bf16 %v328
        %v337 = vunpack.c.l.bf16 %v329
        %v338 = vunpack.c.l.bf16 %v330
        %v339 = vunpack.c.l.bf16 %v331
        %v340 = vunpack.c.l.bf16 %v332
        %v341 = vunpack.c.l.bf16 %v333
        %vm342 = vcmask 130048
        %343 = vst.msk [vmem:[#allocation3] sm:$0xff] %vm342, %v334
        %344 = vst.msk [vmem:[#allocation3 + $0x8] sm:$0xff] %vm342, %v335
        %345 = vst.msk [vmem:[#allocation3 + $0x10] sm:$0xff] %vm342, %v336
        %346 = vst.msk [vmem:[#allocation3 + $0x18] sm:$0xff] %vm342, %v337
        %347 = vst.msk [vmem:[#allocation3 + $0x20] sm:$0xff] %vm342, %v338
        %348 = vst.msk [vmem:[#allocation3 + $0x28] sm:$0xff] %vm342, %v339
        %349 = vst.msk [vmem:[#allocation3 + $0x30] sm:$0xff] %vm342, %v340
        %350 = vst.msk [vmem:[#allocation3 + $0x38] sm:$0xff] %vm342, %v341
        %359 = vrot.lane.b32.xlu0 %v334, 16
        %v360 = vpop.permute.xlu0 %359
        %361 = vrot.lane.b32.xlu0 %v335, 16
        %v362 = vpop.permute.xlu0 %361
        %363 = vrot.lane.b32.xlu0 %v336, 16
        %v364 = vpop.permute.xlu0 %363
        %365 = vrot.lane.b32.xlu0 %v337, 16
        %v366 = vpop.permute.xlu0 %365
        %367 = vrot.lane.b32.xlu0 %v338, 16
        %v368 = vpop.permute.xlu0 %367
        %369 = vrot.lane.b32.xlu0 %v339, 16
        %v370 = vpop.permute.xlu0 %369
        %371 = vrot.lane.b32.xlu0 %v340, 16
        %v372 = vpop.permute.xlu0 %371
        %373 = vrot.lane.b32.xlu0 %v341, 16
        %v374 = vpop.permute.xlu0 %373
        %vm383 = vcmask 261248
        %384 = vst.msk [vmem:[#allocation3] sm:$0xff] %vm383, %v360
        %385 = vst.msk [vmem:[#allocation3 + $0x8] sm:$0xff] %vm383, %v362
        %386 = vst.msk [vmem:[#allocation3 + $0x10] sm:$0xff] %vm383, %v364
        %387 = vst.msk [vmem:[#allocation3 + $0x18] sm:$0xff] %vm383, %v366
        %388 = vst.msk [vmem:[#allocation3 + $0x20] sm:$0xff] %vm383, %v368
        %389 = vst.msk [vmem:[#allocation3 + $0x28] sm:$0xff] %vm383, %v370
        %390 = vst.msk [vmem:[#allocation3 + $0x30] sm:$0xff] %vm383, %v372
        %391 = vst.msk [vmem:[#allocation3 + $0x38] sm:$0xff] %vm383, %v374
        %v392 = vld [vmem:[%s1] sm:$0xf]
        %v393 = vld [vmem:[%s1 + $0x4] sm:$0xf]
        %v394 = vld [vmem:[%s2] sm:$0x1]
        %v396 = vlaneseq
        %v397 = vshrl.u32 %v396, 7
        %v398 = vsub.s32 0, %v397
        %v399 = vrot.slane %v394, %v398
        %v433 = vunpack.c.l.b16 %v278
        %v434 = vunpack.c.l.b16 %v279
        %v435 = vunpack.c.l.b16 %v280
        %v436 = vunpack.c.l.b16 %v281
        %v437 = vunpack.c.l.b16 %v282
        %v438 = vunpack.c.l.b16 %v283
        %v439 = vunpack.c.l.b16 %v284
        %v440 = vunpack.c.l.b16 %v285
        %v441 = vunpack.c.l.b16 %v286
        %v442 = vunpack.c.l.b16 %v287
        %v443 = vunpack.c.l.b16 %v288
        %v444 = vunpack.c.l.b16 %v289
        %v445 = vunpack.c.l.b16 %v290
        %v446 = vunpack.c.l.b16 %v291
        %v447 = vunpack.c.l.b16 %v292
        %v448 = vunpack.c.l.b16 %v293
        %v449 = vunpack.c.l.b16 %v294
        %v450 = vunpack.c.l.b16 %v295
        %v451 = vunpack.c.l.b16 %v296
        %v452 = vunpack.c.l.b16 %v297
        %v453 = vunpack.c.l.b16 %v298
        %v454 = vunpack.c.l.b16 %v299
        %v455 = vunpack.c.l.b16 %v300
        %v456 = vunpack.c.l.b16 %v301
        %v457 = vunpack.c.l.b16 %v302
        %v458 = vunpack.c.l.b16 %v303
        %v459 = vunpack.c.l.b16 %v304
        %v460 = vunpack.c.l.b16 %v305
        %v461 = vunpack.c.l.b16 %v306
        %v462 = vunpack.c.l.b16 %v307
        %v463 = vunpack.c.l.b16 %v308
        %v464 = vunpack.c.l.b16 %v309
        %v465 = vpack.c.b16 %v434, %v433
        %v466 = vpack.c.b16 %v436, %v435
        %v467 = vpack.c.b16 %v438, %v437
        %v468 = vpack.c.b16 %v440, %v439
        %v469 = vpack.c.b16 %v442, %v441
        %v470 = vpack.c.b16 %v444, %v443
        %v471 = vpack.c.b16 %v446, %v445
        %v472 = vpack.c.b16 %v448, %v447
        %v473 = vpack.c.b16 %v450, %v449
        %v474 = vpack.c.b16 %v452, %v451
        %v475 = vpack.c.b16 %v454, %v453
        %v476 = vpack.c.b16 %v456, %v455
        %v477 = vpack.c.b16 %v458, %v457
        %v478 = vpack.c.b16 %v460, %v459
        %v479 = vpack.c.b16 %v462, %v461
        %v480 = vpack.c.b16 %v464, %v463
        %v483 = vunpack.c.l.b16 %v392
        %v484 = vunpack.c.l.b16 %v393
        %v485 = vpack.c.b16 %v484, %v483
        %v488 = vsel %vm342, %v465, 0
        %v491 = vsel %vm342, %v466, 0
        %v494 = vsel %vm342, %v467, 0
        %v497 = vsel %vm342, %v468, 0
        %v500 = vsel %vm342, %v469, 0
        %v503 = vsel %vm342, %v470, 0
        %v506 = vsel %vm342, %v471, 0
        %v509 = vsel %vm342, %v472, 0
        %v512 = vsel %vm342, %v473, 0
        %v515 = vsel %vm342, %v474, 0
        %v518 = vsel %vm342, %v475, 0
        %v521 = vsel %vm342, %v476, 0
        %v524 = vsel %vm342, %v477, 0
        %v527 = vsel %vm342, %v478, 0
        %v530 = vsel %vm342, %v479, 0
        %v533 = vsel %vm342, %v480, 0
        %535 = vmatprep.subr.bf16.mxu0 0
        %536 = vmatpush1.bf16.msra.mxu0 %v485
        %537 = vmatprep.subr.bf16.mxu0 0
        %538 = vmatpush1.bf16.msra.mxu0 0
        %539 = vmatprep.subr.bf16.mxu0 0
        %540 = vmatpush1.bf16.msra.mxu0 0
        %541 = vmatprep.subr.bf16.mxu0 0
        %542 = vmatpush1.bf16.msra.mxu0 0
        %543 = vmatprep.subr.bf16.mxu0 0
        %544 = vmatpush1.bf16.msra.mxu0 0
        %545 = vmatprep.subr.bf16.mxu0 0
        %546 = vmatpush1.bf16.msra.mxu0 0
        %547 = vmatprep.subr.bf16.mxu0 0
        %548 = vmatpush1.bf16.msra.mxu0 0
        %549 = vmatprep.subr.bf16.mxu0 0
        %550 = vmatpush1.bf16.msra.mxu0 0
        %551 = vmatprep.subr.bf16.mxu0 0
        %552 = vmatpush1.bf16.msra.mxu0 0
        %553 = vmatprep.subr.bf16.mxu0 0
        %554 = vmatpush1.bf16.msra.mxu0 0
        %555 = vmatprep.subr.bf16.mxu0 0
        %556 = vmatpush1.bf16.msra.mxu0 0
        %557 = vmatprep.subr.bf16.mxu0 0
        %558 = vmatpush1.bf16.msra.mxu0 0
        %559 = vmatprep.subr.bf16.mxu0 0
        %560 = vmatpush1.bf16.msra.mxu0 0
        %561 = vmatprep.subr.bf16.mxu0 0
        %562 = vmatpush1.bf16.msra.mxu0 0
        %563 = vmatprep.subr.bf16.mxu0 0
        %564 = vmatpush1.bf16.msra.mxu0 0
        %565 = vmatprep.subr.bf16.mxu0 0
        %566 = vmatpush1.bf16.msra.mxu0 0
        %567 = vmatprep.mubr.bf16.mxu0 0
        %568 = vmatmul.mubr.bf16.gmra.mrb[0].mxu0 %v488
        %v569 = vpop.f32.mrb[0].mxu0
        %v570 = vadd.f32 %v399, %v569
        %v571 = vpop.f32.mrb[0].mxu0
        %v572 = vpop.f32.mrb[0].mxu0
        %v573 = vadd.f32 %v399, %v572
        %v574 = vpop.f32.mrb[0].mxu0
        %575 = vmatprep.mubr.bf16.mxu0 0
        %576 = vmatmul.mubr.bf16.gmra.mrb[0].mxu0 %v491
        %v577 = vpop.f32.mrb[0].mxu0
        %v578 = vadd.f32 %v399, %v577
        %v579 = vpop.f32.mrb[0].mxu0
        %v580 = vpop.f32.mrb[0].mxu0
        %v581 = vadd.f32 %v399, %v580
        %v582 = vpop.f32.mrb[0].mxu0
        %583 = vmatprep.mubr.bf16.mxu0 0
        %584 = vmatmul.mubr.bf16.gmra.mrb[0].mxu0 %v494
        %v585 = vpop.f32.mrb[0].mxu0
        %v586 = vadd.f32 %v399, %v585
        %v587 = vpop.f32.mrb[0].mxu0
        %v588 = vpop.f32.mrb[0].mxu0
        %v589 = vadd.f32 %v399, %v588
        %v590 = vpop.f32.mrb[0].mxu0
        %591 = vmatprep.mubr.bf16.mxu0 0
        %592 = vmatmul.mubr.bf16.gmra.mrb[0].mxu0 %v497
        %v593 = vpop.f32.mrb[0].mxu0
        %v594 = vadd.f32 %v399, %v593
        %v595 = vpop.f32.mrb[0].mxu0
        %v596 = vpop.f32.mrb[0].mxu0
        %v597 = vadd.f32 %v399, %v596
        %v598 = vpop.f32.mrb[0].mxu0
        %599 = vmatprep.mubr.bf16.mxu0 0
        %600 = vmatmul.mubr.bf16.gmra.mrb[0].mxu0 %v500
        %v601 = vpop.f32.mrb[0].mxu0
        %v602 = vadd.f32 %v399, %v601
        %v603 = vpop.f32.mrb[0].mxu0
        %v604 = vpop.f32.mrb[0].mxu0
        %v605 = vadd.f32 %v399, %v604
        %v606 = vpop.f32.mrb[0].mxu0
        %607 = vmatprep.mubr.bf16.mxu0 0
        %608 = vmatmul.mubr.bf16.gmra.mrb[0].mxu0 %v503
        %v609 = vpop.f32.mrb[0].mxu0
        %v610 = vadd.f32 %v399, %v609
        %v611 = vpop.f32.mrb[0].mxu0
        %v612 = vpop.f32.mrb[0].mxu0
        %v613 = vadd.f32 %v399, %v612
        %v614 = vpop.f32.mrb[0].mxu0
        %615 = vmatprep.mubr.bf16.mxu0 0
        %616 = vmatmul.mubr.bf16.gmra.mrb[0].mxu0 %v506
        %v617 = vpop.f32.mrb[0].mxu0
        %v618 = vadd.f32 %v399, %v617
        %v619 = vpop.f32.mrb[0].mxu0
        %v620 = vpop.f32.mrb[0].mxu0
        %v621 = vadd.f32 %v399, %v620
        %v622 = vpop.f32.mrb[0].mxu0
        %623 = vmatprep.mubr.bf16.mxu0 0
        %624 = vmatmul.mubr.bf16.gmra.mrb[0].mxu0 %v509
        %v625 = vpop.f32.mrb[0].mxu0
        %v626 = vadd.f32 %v399, %v625
        %v627 = vpop.f32.mrb[0].mxu0
        %v628 = vpop.f32.mrb[0].mxu0
        %v629 = vadd.f32 %v399, %v628
        %v630 = vpop.f32.mrb[0].mxu0
        %631 = vmatprep.mubr.bf16.mxu0 0
        %632 = vmatmul.mubr.bf16.gmra.mrb[0].mxu0 %v512
        %v633 = vpop.f32.mrb[0].mxu0
        %v634 = vadd.f32 %v399, %v633
        %v635 = vpop.f32.mrb[0].mxu0
        %v636 = vpop.f32.mrb[0].mxu0
        %v637 = vadd.f32 %v399, %v636
        %v638 = vpop.f32.mrb[0].mxu0
        %639 = vmatprep.mubr.bf16.mxu0 0
        %640 = vmatmul.mubr.bf16.gmra.mrb[0].mxu0 %v515
        %v641 = vpop.f32.mrb[0].mxu0
        %v642 = vadd.f32 %v399, %v641
        %v643 = vpop.f32.mrb[0].mxu0
        %v644 = vpop.f32.mrb[0].mxu0
        %v645 = vadd.f32 %v399, %v644
        %v646 = vpop.f32.mrb[0].mxu0
        %647 = vmatprep.mubr.bf16.mxu0 0
        %648 = vmatmul.mubr.bf16.gmra.mrb[0].mxu0 %v518
        %v649 = vpop.f32.mrb[0].mxu0
        %v650 = vadd.f32 %v399, %v649
        %v651 = vpop.f32.mrb[0].mxu0
        %v652 = vpop.f32.mrb[0].mxu0
        %v653 = vadd.f32 %v399, %v652
        %v654 = vpop.f32.mrb[0].mxu0
        %655 = vmatprep.mubr.bf16.mxu0 0
        %656 = vmatmul.mubr.bf16.gmra.mrb[0].mxu0 %v521
        %v657 = vpop.f32.mrb[0].mxu0
        %v658 = vadd.f32 %v399, %v657
        %v659 = vpop.f32.mrb[0].mxu0
        %v660 = vpop.f32.mrb[0].mxu0
        %v661 = vadd.f32 %v399, %v660
        %v662 = vpop.f32.mrb[0].mxu0
        %663 = vmatprep.mubr.bf16.mxu0 0
        %664 = vmatmul.mubr.bf16.gmra.mrb[0].mxu0 %v524
        %v665 = vpop.f32.mrb[0].mxu0
        %v666 = vadd.f32 %v399, %v665
        %v667 = vpop.f32.mrb[0].mxu0
        %v668 = vpop.f32.mrb[0].mxu0
        %v669 = vadd.f32 %v399, %v668
        %v670 = vpop.f32.mrb[0].mxu0
        %671 = vmatprep.mubr.bf16.mxu0 0
        %672 = vmatmul.mubr.bf16.gmra.mrb[0].mxu0 %v527
        %v673 = vpop.f32.mrb[0].mxu0
        %v674 = vadd.f32 %v399, %v673
        %v675 = vpop.f32.mrb[0].mxu0
        %v676 = vpop.f32.mrb[0].mxu0
        %v677 = vadd.f32 %v399, %v676
        %v678 = vpop.f32.mrb[0].mxu0
        %679 = vmatprep.mubr.bf16.mxu0 0
        %680 = vmatmul.mubr.bf16.gmra.mrb[0].mxu0 %v530
        %v681 = vpop.f32.mrb[0].mxu0
        %v682 = vadd.f32 %v399, %v681
        %v683 = vpop.f32.mrb[0].mxu0
        %v684 = vpop.f32.mrb[0].mxu0
        %v685 = vadd.f32 %v399, %v684
        %v686 = vpop.f32.mrb[0].mxu0
        %687 = vmatprep.mubr.bf16.mxu0 0
        %688 = vmatmul.mubr.bf16.gmra.mrb[0].mxu0 %v533
        %v689 = vpop.f32.mrb[0].mxu0
        %v690 = vadd.f32 %v399, %v689
        %v691 = vpop.f32.mrb[0].mxu0
        %v692 = vpop.f32.mrb[0].mxu0
        %v693 = vadd.f32 %v399, %v692
        %v694 = vpop.f32.mrb[0].mxu0
        %695 = vdwg.mxu0
        %v696 = vmax.f32 %v570, 0.0
        %v697 = vmax.f32 %v573, 0.0
        %v698 = vmax.f32 %v578, 0.0
        %v699 = vmax.f32 %v581, 0.0
        %v700 = vmax.f32 %v586, 0.0
        %v701 = vmax.f32 %v589, 0.0
        %v702 = vmax.f32 %v594, 0.0
        %v703 = vmax.f32 %v597, 0.0
        %v704 = vmax.f32 %v602, 0.0
        %v705 = vmax.f32 %v605, 0.0
        %v706 = vmax.f32 %v610, 0.0
        %v707 = vmax.f32 %v613, 0.0
        %v708 = vmax.f32 %v618, 0.0
        %v709 = vmax.f32 %v621, 0.0
        %v710 = vmax.f32 %v626, 0.0
        %v711 = vmax.f32 %v629, 0.0
        %v712 = vmax.f32 %v634, 0.0
        %v713 = vmax.f32 %v637, 0.0
        %v714 = vmax.f32 %v642, 0.0
        %v715 = vmax.f32 %v645, 0.0
        %v716 = vmax.f32 %v650, 0.0
        %v717 = vmax.f32 %v653, 0.0
        %v718 = vmax.f32 %v658, 0.0
        %v719 = vmax.f32 %v661, 0.0
        %v720 = vmax.f32 %v666, 0.0
        %v721 = vmax.f32 %v669, 0.0
        %v722 = vmax.f32 %v674, 0.0
        %v723 = vmax.f32 %v677, 0.0
        %v724 = vmax.f32 %v682, 0.0
        %v725 = vmax.f32 %v685, 0.0
        %v726 = vmax.f32 %v690, 0.0
        %v727 = vmax.f32 %v693, 0.0
        %v728 = vlaneseq
        %v729 = vshrl.u32 %v728, 7
        %v730 = vadd.s32 %v729, 8
        %v731 = vadd.s32 %v729, 16
        %v732 = vadd.s32 %v729, 24
        %v733 = vadd.s32 %v729, 32
        %v734 = vadd.s32 %v729, 40
        %v735 = vadd.s32 %v729, 48
        %v736 = vadd.s32 %v729, 56
        %vm737 = vcmp.lt.s32.totalorder %v729, 0
        %v738 = vsub.s32 0, %v729
        %v739 = vsel %vm737, %v738, %v729
        %v740 = vshrl.u32 %v739, 3
        %v741 = vand.u32 %v739, 7
        %v742 = vsub.s32 0, %v741
        %v743 = vsel %vm737, %v742, %v741
        %vm744 = vcmp.lt.s32.totalorder %v730, 0
        %v745 = vsub.s32 0, %v730
        %v746 = vsel %vm744, %v745, %v730
        %v747 = vshrl.u32 %v746, 3
        %v748 = vand.u32 %v746, 7
        %v749 = vsub.s32 0, %v748
        %v750 = vsel %vm744, %v749, %v748
        %vm751 = vcmp.lt.s32.totalorder %v731, 0
        %v752 = vsub.s32 0, %v731
        %v753 = vsel %vm751, %v752, %v731
        %v754 = vshrl.u32 %v753, 3
        %v755 = vand.u32 %v753, 7
        %v756 = vsub.s32 0, %v755
        %v757 = vsel %vm751, %v756, %v755
        %vm758 = vcmp.lt.s32.totalorder %v732, 0
        %v759 = vsub.s32 0, %v732
        %v760 = vsel %vm758, %v759, %v732
        %v761 = vshrl.u32 %v760, 3
        %v762 = vand.u32 %v760, 7
        %v763 = vsub.s32 0, %v762
        %v764 = vsel %vm758, %v763, %v762
        %vm765 = vcmp.lt.s32.totalorder %v733, 0
        %v766 = vsub.s32 0, %v733
        %v767 = vsel %vm765, %v766, %v733
        %v768 = vshrl.u32 %v767, 3
        %v769 = vand.u32 %v767, 7
        %v770 = vsub.s32 0, %v769
        %v771 = vsel %vm765, %v770, %v769
        %vm772 = vcmp.lt.s32.totalorder %v734, 0
        %v773 = vsub.s32 0, %v734
        %v774 = vsel %vm772, %v773, %v734
        %v775 = vshrl.u32 %v774, 3
        %v776 = vand.u32 %v774, 7
        %v777 = vsub.s32 0, %v776
        %v778 = vsel %vm772, %v777, %v776
        %vm779 = vcmp.lt.s32.totalorder %v735, 0
        %v780 = vsub.s32 0, %v735
        %v781 = vsel %vm779, %v780, %v735
        %v782 = vshrl.u32 %v781, 3
        %v783 = vand.u32 %v781, 7
        %v784 = vsub.s32 0, %v783
        %v785 = vsel %vm779, %v784, %v783
        %vm786 = vcmp.lt.s32.totalorder %v736, 0
        %v787 = vsub.s32 0, %v736
        %v788 = vsel %vm786, %v787, %v736
        %v789 = vshrl.u32 %v788, 3
        %v790 = vand.u32 %v788, 7
        %v791 = vsub.s32 0, %v790
        %v792 = vsel %vm786, %v791, %v790
        %vm793 = vcmp.ne.s32.totalorder %v743, 0
        %vm794 = vcmp.ne.s32.totalorder %v750, 0
        %vm795 = vcmp.ne.s32.totalorder %v757, 0
        %vm796 = vcmp.ne.s32.totalorder %v764, 0
        %vm797 = vcmp.ne.s32.totalorder %v771, 0
        %vm798 = vcmp.ne.s32.totalorder %v778, 0
        %vm799 = vcmp.ne.s32.totalorder %v785, 0
        %vm800 = vcmp.ne.s32.totalorder %v792, 0
        %vm801 = vcmp.lt.s32.totalorder %v743, 0
        %vm802 = vcmp.lt.s32.totalorder %v750, 0
        %vm803 = vcmp.lt.s32.totalorder %v757, 0
        %vm804 = vcmp.lt.s32.totalorder %v764, 0
        %vm805 = vcmp.lt.s32.totalorder %v771, 0
        %vm806 = vcmp.lt.s32.totalorder %v778, 0
        %vm807 = vcmp.lt.s32.totalorder %v785, 0
        %vm808 = vcmp.lt.s32.totalorder %v792, 0
        %vm809 = vmand %vm801, %vm793
        %vm810 = vmand %vm802, %vm794
        %vm811 = vmand %vm803, %vm795
        %vm812 = vmand %vm804, %vm796
        %vm813 = vmand %vm805, %vm797
        %vm814 = vmand %vm806, %vm798
        %vm815 = vmand %vm807, %vm799
        %vm816 = vmand %vm808, %vm800
        %v817 = vadd.s32 %v743, 8
        %v818 = vadd.s32 %v750, 8
        %v819 = vadd.s32 %v757, 8
        %v820 = vadd.s32 %v764, 8
        %v821 = vadd.s32 %v771, 8
        %v822 = vadd.s32 %v778, 8
        %v823 = vadd.s32 %v785, 8
        %v824 = vadd.s32 %v792, 8
        %v825 = vsel %vm809, %v817, %v743
        %v826 = vsel %vm810, %v818, %v750
        %v827 = vsel %vm811, %v819, %v757
        %v828 = vsel %vm812, %v820, %v764
        %v829 = vsel %vm813, %v821, %v771
        %v830 = vsel %vm814, %v822, %v778
        %v831 = vsel %vm815, %v823, %v785
        %v832 = vsel %vm816, %v824, %v792
        %vm833 = vcmp.ne.s32.totalorder %v825, 0
        %vm834 = vcmp.ne.s32.totalorder %v826, 0
        %vm835 = vcmp.ne.s32.totalorder %v827, 0
        %vm836 = vcmp.ne.s32.totalorder %v828, 0
        %vm837 = vcmp.ne.s32.totalorder %v829, 0
        %vm838 = vcmp.ne.s32.totalorder %v830, 0
        %vm839 = vcmp.ne.s32.totalorder %v831, 0
        %vm840 = vcmp.ne.s32.totalorder %v832, 0
        %v841 = vsel %vm833, 1, 0
        %v842 = vsel %vm834, 1, 0
        %v843 = vsel %vm835, 1, 0
        %v844 = vsel %vm836, 1, 0
        %v845 = vsel %vm837, 1, 0
        %v846 = vsel %vm838, 1, 0
        %v847 = vsel %vm839, 1, 0
        %v848 = vsel %vm840, 1, 0
        %v849 = vcvt.s32.f32 %v841
        %v850 = vcvt.s32.f32 %v842
        %v851 = vcvt.s32.f32 %v843
        %v852 = vcvt.s32.f32 %v844
        %v853 = vcvt.s32.f32 %v845
        %v854 = vcvt.s32.f32 %v846
        %v855 = vcvt.s32.f32 %v847
        %v856 = vcvt.s32.f32 %v848
        %vm857 = vcmp.ge.s32.totalorder %v729, 8
        %vm858 = vcmp.ge.s32.totalorder %v730, 8
        %vm859 = vcmp.ge.s32.totalorder %v731, 8
        %vm860 = vcmp.ge.s32.totalorder %v732, 8
        %vm861 = vcmp.ge.s32.totalorder %v733, 8
        %vm862 = vcmp.ge.s32.totalorder %v734, 8
        %vm863 = vcmp.ge.s32.totalorder %v735, 8
        %vm864 = vcmp.ge.s32.totalorder %v736, 8
        %v865 = vsel %vm857, 1, 0
        %v866 = vsel %vm858, 1, 0
        %v867 = vsel %vm859, 1, 0
        %v868 = vsel %vm860, 1, 0
        %v869 = vsel %vm861, 1, 0
        %v870 = vsel %vm862, 1, 0
        %v871 = vsel %vm863, 1, 0
        %v872 = vsel %vm864, 1, 0
        %v873 = vcvt.s32.f32 %v865
        %v874 = vcvt.s32.f32 %v866
        %v875 = vcvt.s32.f32 %v867
        %v876 = vcvt.s32.f32 %v868
        %v877 = vcvt.s32.f32 %v869
        %v878 = vcvt.s32.f32 %v870
        %v879 = vcvt.s32.f32 %v871
        %v880 = vcvt.s32.f32 %v872
        %v881 = vmul.f32 %v873, %v849
        %v882 = vmul.f32 %v874, %v850
        %v883 = vmul.f32 %v875, %v851
        %v884 = vmul.f32 %v876, %v852
        %v885 = vmul.f32 %v877, %v853
        %v886 = vmul.f32 %v878, %v854
        %v887 = vmul.f32 %v879, %v855
        %v888 = vmul.f32 %v880, %v856
        %vm897 = vcmask 1046528
        %v898 = vrot.slane %v881, 1
        %v899 = vrot.slane %v882, 1
        %v900 = vsel %vm897, %v898, %v899
        %v901 = vrot.slane %v883, 1
        %v902 = vsel %vm897, %v899, %v901
        %v903 = vrot.slane %v884, 1
        %v904 = vsel %vm897, %v901, %v903
        %v905 = vrot.slane %v885, 1
        %v906 = vsel %vm897, %v903, %v905
        %v907 = vrot.slane %v886, 1
        %v908 = vsel %vm897, %v905, %v907
        %v909 = vrot.slane %v887, 1
        %v910 = vsel %vm897, %v907, %v909
        %v911 = vrot.slane %v888, 1
        %v912 = vsel %vm897, %v909, %v911
        %v922 = vmul.f32 %v718, %v898
        %v923 = vmul.f32 %v719, %v900
        %v924 = vmul.f32 %v720, %v902
        %v925 = vmul.f32 %v721, %v904
        %v926 = vmul.f32 %v722, %v906
        %v927 = vmul.f32 %v723, %v908
        %v928 = vmul.f32 %v724, %v910
        %v929 = vmul.f32 %v725, %v912
        %v930 = vmul.f32 %v726, %v911
        %v931 = vpack.c.bf16 %v923, %v922
        %v932 = vpack.c.bf16 %v925, %v924
        %v933 = vpack.c.bf16 %v927, %v926
        %v934 = vpack.c.bf16 %v929, %v928
        %v935 = vpack.c.bf16 %v930, %v930
        %vm936 = vsmask.f32 4352
        %v938 = vshrl.u32 %v931, 16
        %v940 = vrot.slane %v938, 3
        %v941 = vshll.u32 %v931, 16
        %v943 = vrot.slane %v941, 4
        %v944 = vor.u32 %v940, %v943
        %v946 = vshrl.u32 %v932, 16
        %v948 = vrot.slane %v946, 3
        %v949 = vshll.u32 %v932, 16
        %v951 = vrot.slane %v949, 4
        %v952 = vor.u32 %v948, %v951
        %v953 = vsel %vm936, %v944, %v952
        %v955 = vshrl.u32 %v933, 16
        %v957 = vrot.slane %v955, 3
        %v958 = vshll.u32 %v933, 16
        %v960 = vrot.slane %v958, 4
        %v961 = vor.u32 %v957, %v960
        %v962 = vsel %vm936, %v952, %v961
        %v964 = vshrl.u32 %v934, 16
        %v966 = vrot.slane %v964, 3
        %v967 = vshll.u32 %v934, 16
        %v969 = vrot.slane %v967, 4
        %v970 = vor.u32 %v966, %v969
        %v971 = vsel %vm936, %v961, %v970
        %v973 = vshrl.u32 %v935, 16
        %v975 = vrot.slane %v973, 3
        %v976 = vshll.u32 %v935, 16
        %v978 = vrot.slane %v976, 4
        %v979 = vor.u32 %v975, %v978
        %v980 = vsel %vm936, %v970, %v979
        %vm985 = vcmask 31744
        %986 = vst.msk [vmem:[#allocation2] sm:$0xff] %vm985, %v953
        %987 = vst.msk [vmem:[#allocation2 + $0x8] sm:$0xff] %vm985, %v962
        %988 = vst.msk [vmem:[#allocation2 + $0x10] sm:$0xff] %vm985, %v971
        %989 = vst.msk [vmem:[#allocation2 + $0x18] sm:$0xff] %vm985, %v980
        %v990 = vmul.f32 %v711, %v873
        %v991 = vmul.f32 %v712, %v874
        %v992 = vmul.f32 %v713, %v875
        %v993 = vmul.f32 %v714, %v876
        %v994 = vmul.f32 %v715, %v877
        %v995 = vmul.f32 %v716, %v878
        %v996 = vmul.f32 %v717, %v879
        %v997 = vmul.f32 %v718, %v880
        %v998 = vpack.c.bf16 %v991, %v990
        %v999 = vpack.c.bf16 %v993, %v992
        %v1000 = vpack.c.bf16 %v995, %v994
        %v1001 = vpack.c.bf16 %v997, %v996
        %1006 = vrot.lane.b32.xlu0 %v998, 4
        %v1007 = vpop.permute.xlu0 %1006
        %1008 = vrot.lane.b32.xlu0 %v999, 4
        %v1009 = vpop.permute.xlu0 %1008
        %1010 = vrot.lane.b32.xlu0 %v1000, 4
        %v1011 = vpop.permute.xlu0 %1010
        %1012 = vrot.lane.b32.xlu0 %v1001, 4
        %v1013 = vpop.permute.xlu0 %1012
        %vm1018 = vcmask 64544
        %1019 = vst.msk [vmem:[#allocation2] sm:$0xff] %vm1018, %v1007
        %1020 = vst.msk [vmem:[#allocation2 + $0x8] sm:$0xff] %vm1018, %v1009
        %1021 = vst.msk [vmem:[#allocation2 + $0x10] sm:$0xff] %vm1018, %v1011
        %1022 = vst.msk [vmem:[#allocation2 + $0x18] sm:$0xff] %vm1018, %v1013
        %v1023 = vmul.f32 %v719, %v873
        %v1024 = vmul.f32 %v720, %v874
        %v1025 = vmul.f32 %v721, %v875
        %v1026 = vmul.f32 %v722, %v876
        %v1027 = vmul.f32 %v723, %v877
        %v1028 = vmul.f32 %v724, %v878
        %v1029 = vmul.f32 %v725, %v879
        %v1030 = vmul.f32 %v726, %v880
        %v1031 = vpack.c.bf16 %v1024, %v1023
        %v1032 = vpack.c.bf16 %v1026, %v1025
        %v1033 = vpack.c.bf16 %v1028, %v1027
        %v1034 = vpack.c.bf16 %v1030, %v1029
        %1039 = vrot.lane.b32.xlu0 %v1031, 8
        %v1040 = vpop.permute.xlu0 %1039
        %1041 = vrot.lane.b32.xlu0 %v1032, 8
        %v1042 = vpop.permute.xlu0 %1041
        %1043 = vrot.lane.b32.xlu0 %v1033, 8
        %v1044 = vpop.permute.xlu0 %1043
        %1045 = vrot.lane.b32.xlu0 %v1034, 8
        %v1046 = vpop.permute.xlu0 %1045
        %vm1051 = vcmask 97344
        %1052 = vst.msk [vmem:[#allocation2] sm:$0xff] %vm1051, %v1040
        %1053 = vst.msk [vmem:[#allocation2 + $0x8] sm:$0xff] %vm1051, %v1042
        %1054 = vst.msk [vmem:[#allocation2 + $0x10] sm:$0xff] %vm1051, %v1044
        %1055 = vst.msk [vmem:[#allocation2 + $0x18] sm:$0xff] %vm1051, %v1046
        %v1064 = vrot.slane %v849, 1
        %v1065 = vrot.slane %v850, 1
        %v1066 = vsel %vm897, %v1064, %v1065
        %v1067 = vrot.slane %v851, 1
        %v1068 = vsel %vm897, %v1065, %v1067
        %v1069 = vrot.slane %v852, 1
        %v1070 = vsel %vm897, %v1067, %v1069
        %v1071 = vrot.slane %v853, 1
        %v1072 = vsel %vm897, %v1069, %v1071
        %v1073 = vrot.slane %v854, 1
        %v1074 = vsel %vm897, %v1071, %v1073
        %v1075 = vrot.slane %v855, 1
        %v1076 = vsel %vm897, %v1073, %v1075
        %v1077 = vrot.slane %v856, 1
        %v1078 = vsel %vm897, %v1075, %v1077
        %v1088 = vmul.f32 %v703, %v1064
        %v1089 = vmul.f32 %v704, %v1066
        %v1090 = vmul.f32 %v705, %v1068
        %v1091 = vmul.f32 %v706, %v1070
        %v1092 = vmul.f32 %v707, %v1072
        %v1093 = vmul.f32 %v708, %v1074
        %v1094 = vmul.f32 %v709, %v1076
        %v1095 = vmul.f32 %v710, %v1078
        %v1096 = vmul.f32 %v711, %v1077
        %v1097 = vpack.c.bf16 %v1089, %v1088
        %v1098 = vpack.c.bf16 %v1091, %v1090
        %v1099 = vpack.c.bf16 %v1093, %v1092
        %v1100 = vpack.c.bf16 %v1095, %v1094
        %v1101 = vpack.c.bf16 %v1096, %v1096
        %v1103 = vshrl.u32 %v1097, 16
        %v1105 = vrot.slane %v1103, 3
        %v1106 = vshll.u32 %v1097, 16
        %v1108 = vrot.slane %v1106, 4
        %v1109 = vor.u32 %v1105, %v1108
        %v1111 = vshrl.u32 %v1098, 16
        %v1113 = vrot.slane %v1111, 3
        %v1114 = vshll.u32 %v1098, 16
        %v1116 = vrot.slane %v1114, 4
        %v1117 = vor.u32 %v1113, %v1116
        %v1118 = vsel %vm936, %v1109, %v1117
        %v1120 = vshrl.u32 %v1099, 16
        %v1122 = vrot.slane %v1120, 3
        %v1123 = vshll.u32 %v1099, 16
        %v1125 = vrot.slane %v1123, 4
        %v1126 = vor.u32 %v1122, %v1125
        %v1127 = vsel %vm936, %v1117, %v1126
        %v1129 = vshrl.u32 %v1100, 16
        %v1131 = vrot.slane %v1129, 3
        %v1132 = vshll.u32 %v1100, 16
        %v1134 = vrot.slane %v1132, 4
        %v1135 = vor.u32 %v1131, %v1134
        %v1136 = vsel %vm936, %v1126, %v1135
        %v1138 = vshrl.u32 %v1101, 16
        %v1140 = vrot.slane %v1138, 3
        %v1141 = vshll.u32 %v1101, 16
        %v1143 = vrot.slane %v1141, 4
        %v1144 = vor.u32 %v1140, %v1143
        %v1145 = vsel %vm936, %v1135, %v1144
        %1146 = vrot.lane.b32.xlu0 %v1118, 12
        %v1147 = vpop.permute.xlu0 %1146
        %1148 = vrot.lane.b32.xlu0 %v1127, 12
        %v1149 = vpop.permute.xlu0 %1148
        %1150 = vrot.lane.b32.xlu0 %v1136, 12
        %v1151 = vpop.permute.xlu0 %1150
        %1152 = vrot.lane.b32.xlu0 %v1145, 12
        %v1153 = vpop.permute.xlu0 %1152
        %vm1158 = vcmask 130144
        %1159 = vst.msk [vmem:[#allocation2] sm:$0xff] %vm1158, %v1147
        %1160 = vst.msk [vmem:[#allocation2 + $0x8] sm:$0xff] %vm1158, %v1149
        %1161 = vst.msk [vmem:[#allocation2 + $0x10] sm:$0xff] %vm1158, %v1151
        %1162 = vst.msk [vmem:[#allocation2 + $0x18] sm:$0xff] %vm1158, %v1153
        %v1163 = vpack.c.bf16 %v697, %v696
        %v1164 = vpack.c.bf16 %v699, %v698
        %v1165 = vpack.c.bf16 %v701, %v700
        %v1166 = vpack.c.bf16 %v703, %v702
        %1171 = vrot.lane.b32.xlu0 %v1163, 16
        %v1172 = vpop.permute.xlu0 %1171
        %1173 = vrot.lane.b32.xlu0 %v1164, 16
        %v1174 = vpop.permute.xlu0 %1173
        %1175 = vrot.lane.b32.xlu0 %v1165, 16
        %v1176 = vpop.permute.xlu0 %1175
        %1177 = vrot.lane.b32.xlu0 %v1166, 16
        %v1178 = vpop.permute.xlu0 %1177
        %vm1183 = vcmask 162944
        %1184 = vst.msk [vmem:[#allocation2] sm:$0xff] %vm1183, %v1172
        %1185 = vst.msk [vmem:[#allocation2 + $0x8] sm:$0xff] %vm1183, %v1174
        %1186 = vst.msk [vmem:[#allocation2 + $0x10] sm:$0xff] %vm1183, %v1176
        %1187 = vst.msk [vmem:[#allocation2 + $0x18] sm:$0xff] %vm1183, %v1178
        %v1188 = vpack.c.bf16 %v705, %v704
        %v1189 = vpack.c.bf16 %v707, %v706
        %v1190 = vpack.c.bf16 %v709, %v708
        %v1191 = vpack.c.bf16 %v711, %v710
        %1196 = vrot.lane.b32.xlu0 %v1188, 20
        %v1197 = vpop.permute.xlu0 %1196
        %1198 = vrot.lane.b32.xlu0 %v1189, 20
        %v1199 = vpop.permute.xlu0 %1198
        %1200 = vrot.lane.b32.xlu0 %v1190, 20
        %v1201 = vpop.permute.xlu0 %1200
        %1202 = vrot.lane.b32.xlu0 %v1191, 20
        %v1203 = vpop.permute.xlu0 %1202
        %vm1208 = vcmask 195744
        %1209 = vst.msk [vmem:[#allocation2] sm:$0xff] %vm1208, %v1197
        %1210 = vst.msk [vmem:[#allocation2 + $0x8] sm:$0xff] %vm1208, %v1199
        %1211 = vst.msk [vmem:[#allocation2 + $0x10] sm:$0xff] %vm1208, %v1201
        %1212 = vst.msk [vmem:[#allocation2 + $0x18] sm:$0xff] %vm1208, %v1203
        %v1213 = vmul.f32 %v719, %v1064
        %v1214 = vmul.f32 %v720, %v1066
        %v1215 = vmul.f32 %v721, %v1068
        %v1216 = vmul.f32 %v722, %v1070
        %v1217 = vmul.f32 %v723, %v1072
        %v1218 = vmul.f32 %v724, %v1074
        %v1219 = vmul.f32 %v725, %v1076
        %v1220 = vmul.f32 %v726, %v1078
        %v1221 = vmul.f32 %v727, %v1077
        %v1222 = vpack.c.bf16 %v1214, %v1213
        %v1223 = vpack.c.bf16 %v1216, %v1215
        %v1224 = vpack.c.bf16 %v1218, %v1217
        %v1225 = vpack.c.bf16 %v1220, %v1219
        %v1226 = vpack.c.bf16 %v1221, %v1221
        %v1228 = vshrl.u32 %v1222, 16
        %v1230 = vrot.slane %v1228, 3
        %v1231 = vshll.u32 %v1222, 16
        %v1233 = vrot.slane %v1231, 4
        %v1234 = vor.u32 %v1230, %v1233
        %v1236 = vshrl.u32 %v1223, 16
        %v1238 = vrot.slane %v1236, 3
        %v1239 = vshll.u32 %v1223, 16
        %v1241 = vrot.slane %v1239, 4
        %v1242 = vor.u32 %v1238, %v1241
        %v1243 = vsel %vm936, %v1234, %v1242
        %v1245 = vshrl.u32 %v1224, 16
        %v1247 = vrot.slane %v1245, 3
        %v1248 = vshll.u32 %v1224, 16
        %v1250 = vrot.slane %v1248, 4
        %v1251 = vor.u32 %v1247, %v1250
        %v1252 = vsel %vm936, %v1242, %v1251
        %v1254 = vshrl.u32 %v1225, 16
        %v1256 = vrot.slane %v1254, 3
        %v1257 = vshll.u32 %v1225, 16
        %v1259 = vrot.slane %v1257, 4
        %v1260 = vor.u32 %v1256, %v1259
        %v1261 = vsel %vm936, %v1251, %v1260
        %v1263 = vshrl.u32 %v1226, 16
        %v1265 = vrot.slane %v1263, 3
        %v1266 = vshll.u32 %v1226, 16
        %v1268 = vrot.slane %v1266, 4
        %v1269 = vor.u32 %v1265, %v1268
        %v1270 = vsel %vm936, %v1260, %v1269
        %1271 = vrot.lane.b32.xlu0 %v1243, 24
        %v1272 = vpop.permute.xlu0 %1271
        %1273 = vrot.lane.b32.xlu0 %v1252, 24
        %v1274 = vpop.permute.xlu0 %1273
        %1275 = vrot.lane.b32.xlu0 %v1261, 24
        %v1276 = vpop.permute.xlu0 %1275
        %1277 = vrot.lane.b32.xlu0 %v1270, 24
        %v1278 = vpop.permute.xlu0 %1277
        %vm1283 = vcmask 228544
        %1284 = vst.msk [vmem:[#allocation2] sm:$0xff] %vm1283, %v1272
        %1285 = vst.msk [vmem:[#allocation2 + $0x8] sm:$0xff] %vm1283, %v1274
        %1286 = vst.msk [vmem:[#allocation2 + $0x10] sm:$0xff] %vm1283, %v1276
        %1287 = vst.msk [vmem:[#allocation2 + $0x18] sm:$0xff] %vm1283, %v1278
        %v1288 = vpack.c.bf16 %v713, %v712
        %v1289 = vpack.c.bf16 %v715, %v714
        %v1290 = vpack.c.bf16 %v717, %v716
        %v1291 = vpack.c.bf16 %v719, %v718
        %1296 = vrot.lane.b32.xlu0 %v1288, 28
        %v1297 = vpop.permute.xlu0 %1296
        %1298 = vrot.lane.b32.xlu0 %v1289, 28
        %v1299 = vpop.permute.xlu0 %1298
        %1300 = vrot.lane.b32.xlu0 %v1290, 28
        %v1301 = vpop.permute.xlu0 %1300
        %1302 = vrot.lane.b32.xlu0 %v1291, 28
        %v1303 = vpop.permute.xlu0 %1302
        %vm1308 = vcmask 261344
        %1309 = vst.msk [vmem:[#allocation2] sm:$0xff] %vm1308, %v1297
        %1310 = vst.msk [vmem:[#allocation2 + $0x8] sm:$0xff] %vm1308, %v1299
        %1311 = vst.msk [vmem:[#allocation2 + $0x10] sm:$0xff] %vm1308, %v1301
        %1312 = vst.msk [vmem:[#allocation2 + $0x18] sm:$0xff] %vm1308, %v1303
        %v1313 = vpack.c.bf16 %v721, %v720
        %v1314 = vpack.c.bf16 %v723, %v722
        %v1315 = vpack.c.bf16 %v725, %v724
        %v1316 = vpack.c.bf16 %v727, %v726
        %1321 = vrot.lane.b32.xlu0 %v1313, 32
        %v1322 = vpop.permute.xlu0 %1321
        %1323 = vrot.lane.b32.xlu0 %v1314, 32
        %v1324 = vpop.permute.xlu0 %1323
        %1325 = vrot.lane.b32.xlu0 %v1315, 32
        %v1326 = vpop.permute.xlu0 %1325
        %1327 = vrot.lane.b32.xlu0 %v1316, 32
        %v1328 = vpop.permute.xlu0 %1327
        %vm1333 = vcmask 294144
        %1334 = vst.msk [vmem:[#allocation2] sm:$0xff] %vm1333, %v1322
        %1335 = vst.msk [vmem:[#allocation2 + $0x8] sm:$0xff] %vm1333, %v1324
        %1336 = vst.msk [vmem:[#allocation2 + $0x10] sm:$0xff] %vm1333, %v1326
        %1337 = vst.msk [vmem:[#allocation2 + $0x18] sm:$0xff] %vm1333, %v1328
        %v1338 = vld [vmem:[#allocation2] sm:$0xff]
        %v1339 = vld [vmem:[#allocation2 + $0x8] sm:$0xff]
        %v1340 = vld [vmem:[#allocation2 + $0x10] sm:$0xff]
        %v1341 = vld [vmem:[#allocation2 + $0x18] sm:$0xff]
        %v1342 = vld [vmem:[%s3] sm:$0xf]
        %v1343 = vld [vmem:[%s3 + $0x4] sm:$0xf]
        %v1344 = vld [vmem:[%s3 + $0x8] sm:$0xf]
        %v1345 = vld [vmem:[%s3 + $0xc] sm:$0xf]
        %v1346 = vld [vmem:[%s3 + $0x10] sm:$0x3]
        %v1347 = vld [vmem:[%s4] sm:$0x1]
        %v1349 = vlaneseq
        %v1350 = vshrl.u32 %v1349, 7
        %v1351 = vsub.s32 0, %v1350
        %v1352 = vrot.slane %v1347, %v1351
        %v1359 = vunpack.c.l.b16 %v1342
        %v1360 = vunpack.c.l.b16 %v1343
        %v1361 = vunpack.c.l.b16 %v1344
        %v1362 = vunpack.c.l.b16 %v1345
        %v1363 = vunpack.c.l.b16 %v1346
        %v1364 = vpack.c.b16 %v1360, %v1359
        %v1365 = vpack.c.b16 %v1362, %v1361
        %v1366 = vpack.c.b16 %v1363, %v1363
        %vm1369 = vcmask 293888
        %v1371 = vsel %vm1369, %v1338, 0
        %v1374 = vsel %vm1369, %v1339, 0
        %v1377 = vsel %vm1369, %v1340, 0
        %v1380 = vsel %vm1369, %v1341, 0
        %vm1382 = vcmask 1041408
        %v1384 = vsel %vm1382, %v1366, 0
        %1386 = vmatprep.subr.bf16.mxu0 0
        %1387 = vmatpush1.bf16.msra.mxu0 %v1364
        %1388 = vmatprep.subr.bf16.mxu0 0
        %1389 = vmatpush1.bf16.msra.mxu0 %v1365
        %1390 = vmatprep.subr.bf16.mxu0 0
        %1391 = vmatpush1.bf16.msra.mxu0 %v1384
        %1392 = vmatprep.subr.bf16.mxu0 0
        %1393 = vmatpush1.bf16.msra.mxu0 0
        %1394 = vmatprep.subr.bf16.mxu0 0
        %1395 = vmatpush1.bf16.msra.mxu0 0
        %1396 = vmatprep.subr.bf16.mxu0 0
        %1397 = vmatpush1.bf16.msra.mxu0 0
        %1398 = vmatprep.subr.bf16.mxu0 0
        %1399 = vmatpush1.bf16.msra.mxu0 0
        %1400 = vmatprep.subr.bf16.mxu0 0
        %1401 = vmatpush1.bf16.msra.mxu0 0
        %1402 = vmatprep.subr.bf16.mxu0 0
        %1403 = vmatpush1.bf16.msra.mxu0 0
        %1404 = vmatprep.subr.bf16.mxu0 0
        %1405 = vmatpush1.bf16.msra.mxu0 0
        %1406 = vmatprep.subr.bf16.mxu0 0
        %1407 = vmatpush1.bf16.msra.mxu0 0
        %1408 = vmatprep.subr.bf16.mxu0 0
        %1409 = vmatpush1.bf16.msra.mxu0 0
        %1410 = vmatprep.subr.bf16.mxu0 0
        %1411 = vmatpush1.bf16.msra.mxu0 0
        %1412 = vmatprep.subr.bf16.mxu0 0
        %1413 = vmatpush1.bf16.msra.mxu0 0
        %1414 = vmatprep.subr.bf16.mxu0 0
        %1415 = vmatpush1.bf16.msra.mxu0 0
        %1416 = vmatprep.subr.bf16.mxu0 0
        %1417 = vmatpush1.bf16.msra.mxu0 0
        %1418 = vmatprep.mubr.bf16.mxu0 0
        %1419 = vmatmul.mubr.bf16.gmra.mrb[0].mxu0 %v1371
        %v1420 = vpop.f32.mrb[0].mxu0
        %v1421 = vadd.f32 %v1352, %v1420
        %v1422 = vpop.f32.mrb[0].mxu0
        %v1423 = vpop.f32.mrb[0].mxu0
        %v1424 = vadd.f32 %v1352, %v1423
        %v1425 = vpop.f32.mrb[0].mxu0
        %1426 = vmatprep.mubr.bf16.mxu0 0
        %1427 = vmatmul.mubr.bf16.gmra.mrb[0].mxu0 %v1374
        %v1428 = vpop.f32.mrb[0].mxu0
        %v1429 = vadd.f32 %v1352, %v1428
        %v1430 = vpop.f32.mrb[0].mxu0
        %v1431 = vpop.f32.mrb[0].mxu0
        %v1432 = vadd.f32 %v1352, %v1431
        %v1433 = vpop.f32.mrb[0].mxu0
        %1434 = vmatprep.mubr.bf16.mxu0 0
        %1435 = vmatmul.mubr.bf16.gmra.mrb[0].mxu0 %v1377
        %v1436 = vpop.f32.mrb[0].mxu0
        %v1437 = vadd.f32 %v1352, %v1436
        %v1438 = vpop.f32.mrb[0].mxu0
        %v1439 = vpop.f32.mrb[0].mxu0
        %v1440 = vadd.f32 %v1352, %v1439
        %v1441 = vpop.f32.mrb[0].mxu0
        %1442 = vmatprep.mubr.bf16.mxu0 0
        %1443 = vmatmul.mubr.bf16.gmra.mrb[0].mxu0 %v1380
        %v1444 = vpop.f32.mrb[0].mxu0
        %v1445 = vadd.f32 %v1352, %v1444
        %v1446 = vpop.f32.mrb[0].mxu0
        %v1447 = vpop.f32.mrb[0].mxu0
        %v1448 = vadd.f32 %v1352, %v1447
        %v1449 = vpop.f32.mrb[0].mxu0
        %1450 = vdwg.mxu0
        %v1451 = vmax.f32 %v1421, 0.0
        %v1452 = vmax.f32 %v1424, 0.0
        %v1453 = vmax.f32 %v1429, 0.0
        %v1454 = vmax.f32 %v1432, 0.0
        %v1455 = vmax.f32 %v1437, 0.0
        %v1456 = vmax.f32 %v1440, 0.0
        %v1457 = vmax.f32 %v1445, 0.0
        %v1458 = vmax.f32 %v1448, 0.0
        %v1459 = vpack.c.bf16 %v1452, %v1451
        %v1460 = vpack.c.bf16 %v1454, %v1453
        %v1461 = vpack.c.bf16 %v1456, %v1455
        %v1462 = vpack.c.bf16 %v1458, %v1457
        %v1463 = vld [vmem:[%s5] sm:$0x3]
        %v1464 = vld [vmem:[%s6] sm:$0x1]
        %v1466 = vlaneseq
        %v1467 = vshrl.u32 %v1466, 7
        %v1468 = vsub.s32 0, %v1467
        %v1469 = vrot.slane %v1464, %v1468
        %v1472 = vsel %vm985, %v1459, 0
        %v1475 = vsel %vm985, %v1460, 0
        %v1478 = vsel %vm985, %v1461, 0
        %v1481 = vsel %vm985, %v1462, 0
        %v1484 = vsel %vm1382, %v1463, 0
        %1486 = vmatprep.subr.bf16.mxu0 0
        %1487 = vmatpush1.bf16.msra.mxu0 %v1484
        %1488 = vmatprep.subr.bf16.mxu0 0
        %1489 = vmatpush1.bf16.msra.mxu0 0
        %1490 = vmatprep.subr.bf16.mxu0 0
        %1491 = vmatpush1.bf16.msra.mxu0 0
        %1492 = vmatprep.subr.bf16.mxu0 0
        %1493 = vmatpush1.bf16.msra.mxu0 0
        %1494 = vmatprep.subr.bf16.mxu0 0
        %1495 = vmatpush1.bf16.msra.mxu0 0
        %1496 = vmatprep.subr.bf16.mxu0 0
        %1497 = vmatpush1.bf16.msra.mxu0 0
        %1498 = vmatprep.subr.bf16.mxu0 0
        %1499 = vmatpush1.bf16.msra.mxu0 0
        %1500 = vmatprep.subr.bf16.mxu0 0
        %1501 = vmatpush1.bf16.msra.mxu0 0
        %1502 = vmatprep.subr.bf16.mxu0 0
        %1503 = vmatpush1.bf16.msra.mxu0 0
        %1504 = vmatprep.subr.bf16.mxu0 0
        %1505 = vmatpush1.bf16.msra.mxu0 0
        %1506 = vmatprep.subr.bf16.mxu0 0
        %1507 = vmatpush1.bf16.msra.mxu0 0
        %1508 = vmatprep.subr.bf16.mxu0 0
        %1509 = vmatpush1.bf16.msra.mxu0 0
        %1510 = vmatprep.subr.bf16.mxu0 0
        %1511 = vmatpush1.bf16.msra.mxu0 0
        %1512 = vmatprep.subr.bf16.mxu0 0
        %1513 = vmatpush1.bf16.msra.mxu0 0
        %1514 = vmatprep.subr.bf16.mxu0 0
        %1515 = vmatpush1.bf16.msra.mxu0 0
        %1516 = vmatprep.subr.bf16.mxu0 0
        %1517 = vmatpush1.bf16.msra.mxu0 0
        %1518 = vmatprep.mubr.bf16.mxu0 0
        %1519 = vmatmul.mubr.bf16.gmra.mrb[0].mxu0 %v1472
        %v1520 = vpop.f32.mrb[0].mxu0
        %v1521 = vadd.f32 %v1469, %v1520
        %v1522 = vpop.f32.mrb[0].mxu0
        %v1523 = vpop.f32.mrb[0].mxu0
        %v1524 = vadd.f32 %v1469, %v1523
        %v1525 = vpop.f32.mrb[0].mxu0
        %1526 = vmatprep.mubr.bf16.mxu0 0
        %1527 = vmatmul.mubr.bf16.gmra.mrb[0].mxu0 %v1475
        %v1528 = vpop.f32.mrb[0].mxu0
        %v1529 = vadd.f32 %v1469, %v1528
        %v1530 = vpop.f32.mrb[0].mxu0
        %v1531 = vpop.f32.mrb[0].mxu0
        %v1532 = vadd.f32 %v1469, %v1531
        %v1533 = vpop.f32.mrb[0].mxu0
        %1534 = vmatprep.mubr.bf16.mxu0 0
        %1535 = vmatmul.mubr.bf16.gmra.mrb[0].mxu0 %v1478
        %v1536 = vpop.f32.mrb[0].mxu0
        %v1537 = vadd.f32 %v1469, %v1536
        %v1538 = vpop.f32.mrb[0].mxu0
        %v1539 = vpop.f32.mrb[0].mxu0
        %v1540 = vadd.f32 %v1469, %v1539
        %v1541 = vpop.f32.mrb[0].mxu0
        %1542 = vmatprep.mubr.bf16.mxu0 0
        %1543 = vmatmul.mubr.bf16.gmra.mrb[0].mxu0 %v1481
        %v1544 = vpop.f32.mrb[0].mxu0
        %v1545 = vadd.f32 %v1469, %v1544
        %v1546 = vpop.f32.mrb[0].mxu0
        %v1547 = vpop.f32.mrb[0].mxu0
        %v1548 = vadd.f32 %v1469, %v1547
        %v1549 = vpop.f32.mrb[0].mxu0
        %1550 = vdwg.mxu0
        %v1551 = vld [vmem:[#allocation3] sm:$0xff]
        %v1552 = vld [vmem:[#allocation3 + $0x8] sm:$0xff]
        %v1553 = vld [vmem:[#allocation3 + $0x10] sm:$0xff]
        %v1554 = vld [vmem:[#allocation3 + $0x18] sm:$0xff]
        %v1555 = vld [vmem:[#allocation3 + $0x20] sm:$0xff]
        %v1556 = vld [vmem:[#allocation3 + $0x28] sm:$0xff]
        %v1557 = vld [vmem:[#allocation3 + $0x30] sm:$0xff]
        %v1558 = vld [vmem:[#allocation3 + $0x38] sm:$0xff]
        %v1559 = vadd.f32 %v1521, %v1551
        %v1560 = vadd.f32 %v1524, %v1552
        %v1561 = vadd.f32 %v1529, %v1553
        %v1562 = vadd.f32 %v1532, %v1554
        %v1563 = vadd.f32 %v1537, %v1555
        %v1564 = vadd.f32 %v1540, %v1556
        %v1565 = vadd.f32 %v1545, %v1557
        %v1566 = vadd.f32 %v1548, %v1558
        %v1567 = vmax.f32 %v1559, 0.0
        %v1568 = vmax.f32 %v1560, 0.0
        %v1569 = vmax.f32 %v1561, 0.0
        %v1570 = vmax.f32 %v1562, 0.0
        %v1571 = vmax.f32 %v1563, 0.0
        %v1572 = vmax.f32 %v1564, 0.0
        %v1573 = vmax.f32 %v1565, 0.0
        %v1574 = vmax.f32 %v1566, 0.0
        %vm1575 = vcmask 261120
        %1576 = vst.msk [vmem:[%s271] sm:$0xff] %vm1575, %v1567
        %1577 = vst.msk [vmem:[%s271 + $0x8] sm:$0xff] %vm1575, %v1568
        %1578 = vst.msk [vmem:[%s271 + $0x10] sm:$0xff] %vm1575, %v1569
        %1579 = vst.msk [vmem:[%s271 + $0x18] sm:$0xff] %vm1575, %v1570
        %1580 = vst.msk [vmem:[%s271 + $0x20] sm:$0xff] %vm1575, %v1571
        %1581 = vst.msk [vmem:[%s271 + $0x28] sm:$0xff] %vm1575, %v1572
        %1582 = vst.msk [vmem:[%s271 + $0x30] sm:$0xff] %vm1575, %v1573
        %1583 = vst.msk [vmem:[%s271 + $0x38] sm:$0xff] %vm1575, %v1574
        %s1584 = sand.u32 %s181, 1
        %s1585 = scalar_lea.sflag [#allocation5], %s1584
        %s1586 = sand.u32 %s181, 1
        %s1587 = smul.addr %s1586, 64
        %s1588 = scalar_lea.vmem [#allocation4], %s1587
        // Predicated region
        $region49: #{downsample_block_forward.1} parent=47 // pred_check
          %p1589 = pneg %p191
        $region50: #{downsample_block_forward.1} parent=47 // pred_check_branch
          %1591 = sbr.rel (%p1589) target = $region52
        $region51: #{downsample_block_forward.1} parent=47 // pred_region
          %s1593 = ssub.s32 1024, 1024
          %1594 = vsyncadd %s1585, %s1593
          %s1595 = smul.addr %s21, 8
          %s1596 = smul.addr %s1595, 128
          %s1597 = scalar_lea.hbm %s7, %s1596
          %s1598 = sshll.u32 %s1588, 4
          %s1599 = int_to_ptr.vmem [resolvable:$true] %s1598
          %1604 = dma.vmem_to_hbm [thread:$0]  %s1599, 1024, %s1597, %s1585, 128, 128, 8
        $region52: #{downsample_block_forward.1} parent=47 // pred_fallthru
          _
      $region48: #{downsample_block_forward.1} parent=5 // pred_fallthru
        _
      %p1605 = scmp.le.s32.totalorder 2, %s16
      // Predicated region
      $region53: #{downsample_block_forward.1} parent=5 // pred_check
        %p1606 = pneg %p1605
      $region54: #{downsample_block_forward.1} parent=5 // pred_check_branch
        %1608 = sbr.rel (%p1606) target = $region56
      $region55: #{downsample_block_forward.1} parent=5 // pred_region
        %s1609 = ssub.s32 %s16, 2
        // Predicated region
        $region57: #{downsample_block_forward.1} parent=55 // pred_check
          %p1610 = pneg %p197
        $region58: #{downsample_block_forward.1} parent=55 // pred_check_branch
          %1612 = sbr.rel (%p1610) target = $region60
        $region59: #{downsample_block_forward.1} parent=55 // pred_region
          %s1613 = sand.u32 %s182, 1
          %s1614 = scalar_lea.sflag [#allocation5], %s1613
          %s1615 = sand.u32 %s182, 1
          %s1616 = smul.addr %s1615, 64
          %s1617 = scalar_lea.vmem [#allocation4], %s1616
          %1618 = dma.done %s1614, 1024
        $region60: #{downsample_block_forward.1} parent=55 // pred_fallthru
          _
      $region56: #{downsample_block_forward.1} parent=5 // pred_fallthru
        _
    $region6: #{downsample_block_forward.1} parent=1 // loop_footer
      %s20 = sadd.s32 1, %s16
    $region7: #{downsample_block_forward.1} parent=1 // loop_footer_branch
      %15 = sbr.rel target = $region3
    $region8: #{downsample_block_forward.1} parent=1 // loop_exit
      _
    %1619 = vsyncpa [#allocation5], 1
    %s1620 = scalar_lea.sflag [#allocation5], 1
    %1621 = vsyncpa %s1620, 1

</llo_original>
